<compile_context>
chip_gen: v7x
topology: tpu7x:2x2x1
jax: 0.10.0
libtpu: 0.0.40
codegen_flags: <defaults>
</compile_context>

<pallas_src>
import functools

import jax
import jax.numpy as jnp
from jax.experimental import pallas as pl
from jax.experimental.pallas import tpu as pltpu

_BN_EPS = 1e-5
_W_RESIDENT_BYTES = 4 * 1024 * 1024   # keep whole (K, coutp) bf16 weight in VMEM below this
_VMEM_BUDGET = 12 * 1024 * 1024       # double-buffered working-set budget (fits v5e's 16 MiB)


def _round_up(x, m):
    return ((x + m - 1) // m) * m


# ---------------------------------------------------------------------------
# Pallas kernel: fused matmul + bias + epilogue (ReLU or 2*sigmoid on mask cols)
# ---------------------------------------------------------------------------
def _mm_bias_kernel(x_ref, w_ref, b_ref, o_ref, *, epilogue, mask_lo, mask_hi):
    acc = jnp.dot(x_ref[...], w_ref[...], preferred_element_type=jnp.float32)
    y = acc + b_ref[...]
    if epilogue == "relu":
        y = jnp.maximum(y, 0.0)
    elif epilogue == "offset_mask":
        # 2*sigmoid only on the modulator columns.  sigmoid lowers to the EUP,
        # which has its own VLIW slot and is idle here -> essentially free.
        col = jax.lax.broadcasted_iota(jnp.int32, y.shape, dimension=1)
        y = jnp.where((col >= mask_lo) & (col < mask_hi),
                      2.0 * jax.nn.sigmoid(y), y)
    o_ref[...] = y.astype(o_ref.dtype)


def matmul_bias_act(x2, w2, bias, *, epilogue="none", mask_lo=0, mask_hi=0, tm=1024):
    """y = epilogue(x2 @ w2 + bias), returned as (M, cout).

    x2: (M, K) (consumed as bf16), w2: (K, cout), bias: (cout,).
    epilogue: "none" | "relu" | "offset_mask" (2*sigmoid on columns [mask_lo, mask_hi)).
    """
    M, K = x2.shape
    K2, cout = w2.shape
    assert K == K2

    # Lane-dense output width (>=128, multiple of 128): zero-pad weight cols / bias.
    coutp = max(128, _round_up(cout, 128))
    if coutp != cout:
        w2 = jnp.pad(w2, ((0, 0), (0, coutp - cout)))
        bias = jnp.pad(bias, (0, coutp - cout))

    x2 = x2.astype(jnp.bfloat16)                      # no-op when already bf16 (cast at source)
    w2 = w2.astype(jnp.bfloat16)
    b2 = bias.astype(jnp.float32).reshape(1, coutp)

    # Weight residency: a single full-width weight block whose block index never
    # changes is DMA'd once for the whole grid.  Fallback (huge weights only)
    # tiles Cout and accepts the per-M-tile weight re-fetch of the (0, j) map.
    weight_resident = (K * coutp * 2 <= _W_RESIDENT_BYTES) or epilogue == "offset_mask"
    if weight_resident:
        nb = coutp
    else:
        nb = 256 if coutp % 256 == 0 else 128
    if epilogue == "offset_mask":
        assert nb == coutp  # epilogue column mask uses global column indices

    # M tile: multiple of 16 (bf16 sublane packing); keep >=2 tiles so v7x megacore
    # engages; keep double-buffered working set within the conservative VMEM budget.
    tm = min(tm, _round_up(M, 16))
    if _round_up(M, tm) // tm < 2 and M > 16:
        tm = _round_up((M + 1) // 2, 16)

    def _ws_bytes(t):
        return 2 * (t * K * 2 + K * nb * 2 + nb * 4) + 2 * t * nb * 4

    while _ws_bytes(tm) > _VMEM_BUDGET and tm > 16:
        tm = max(16, _round_up(tm // 2, 16))

    Mp = _round_up(M, tm)
    if Mp != M:
        x2 = jnp.pad(x2, ((0, Mp - M), (0, 0)))

    grid_m, grid_n = Mp // tm, coutp // nb
    weight_fetches = 1 if grid_n == 1 else grid_m * grid_n
    cost = pl.CostEstimate(
        flops=2 * Mp * K * coutp,
        transcendentals=Mp * coutp if epilogue == "offset_mask" else 0,
        bytes_accessed=(Mp * K * 2 + weight_fetches * K * nb * 2
                        + Mp * coutp * 4 + grid_m * grid_n * nb * 4),
    )

    out = pl.pallas_call(
        functools.partial(_mm_bias_kernel, epilogue=epilogue,
                          mask_lo=mask_lo, mask_hi=mask_hi),
        out_shape=jax.ShapeDtypeStruct((Mp, coutp), jnp.float32),
        grid=(grid_m, grid_n),
        in_specs=[
            pl.BlockSpec((tm, K), lambda i, j: (i, 0)),
            pl.BlockSpec((K, nb), lambda i, j: (0, j)),
            pl.BlockSpec((1, nb), lambda i, j: (0, j)),
        ],
        out_specs=pl.BlockSpec((tm, nb), lambda i, j: (i, j)),
        compiler_params=pltpu.CompilerParams(
            dimension_semantics=("parallel", "parallel")),
        cost_estimate=cost,
    )(x2, w2, b2)
    return out[:M, :cout]


def _matmul_bias_act_ref(x2, w2, bias, *, epilogue="none", mask_lo=0, mask_hi=0, tm=None):
    """Pure-JAX f32 reference for the Pallas kernel."""
    y = x2.astype(jnp.float32) @ w2.astype(jnp.float32) + bias.astype(jnp.float32)[None, :]
    if epilogue == "relu":
        return jnp.maximum(y, 0.0)
    if epilogue == "offset_mask":
        col = jnp.arange(y.shape[1])[None, :]
        return jnp.where((col >= mask_lo) & (col < mask_hi),
                         2.0 * jax.nn.sigmoid(y), y)
    return y


# ---------------------------------------------------------------------------
# Plain-JAX glue: im2col for the 3x3 offset/mask conv, bilinear sampling
# ---------------------------------------------------------------------------
def extract_patches_3x3(x, pad=1):
    """x: (N,H,W,C) -> (N,H,W,9,C) taps of a 3x3 stride-1 conv (zero padded)."""
    N, H, W, C = x.shape
    xp = jnp.pad(x, ((0, 0), (pad, pad), (pad, pad), (0, 0)))
    taps = [xp[:, i:i + H, j:j + W, :] for i in range(3) for j in range(3)]
    return jnp.stack(taps, axis=3)


def bilinear_sample(x_nhwc, py, px):
    """Bilinear sample x at fractional (py, px); out-of-bounds contributes 0.

    x_nhwc: (N,H,W,C); py/px: (N,Ho,Wo) float32 -> (N,Ho,Wo,C).
    The 4 corner gathers are merged into one jnp.take + fused weighted sum.
    """
    # TODO(synk): data-dependent per-pixel 2-D gather stays in XLA; a Pallas
    # version would need per-tile row-index scalar prefetch.
    N, H, W, C = x_nhwc.shape
    Ho, Wo = py.shape[1], py.shape[2]
    y0f = jnp.floor(py)
    x0f = jnp.floor(px)
    y0 = y0f.astype(jnp.int32)
    x0 = x0f.astype(jnp.int32)
    ly = py - y0f
    lx = px - x0f
    hy = 1.0 - ly
    hx = 1.0 - lx

    xf = x_nhwc.reshape(N * H * W, C)
    boff = (jnp.arange(N, dtype=jnp.int32) * (H * W)).reshape(1, N, 1, 1)

    ys = jnp.stack([y0, y0, y0 + 1, y0 + 1], axis=0)          # (4,N,Ho,Wo)
    xs = jnp.stack([x0, x0 + 1, x0, x0 + 1], axis=0)
    wts = jnp.stack([hy * hx, hy * lx, ly * hx, ly * lx], 0)  # (4,N,Ho,Wo)
    valid = (ys >= 0) & (ys < H) & (xs >= 0) & (xs < W)
    yc = jnp.clip(ys, 0, H - 1)
    xc = jnp.clip(xs, 0, W - 1)
    flat = (boff + yc * W + xc).reshape(-1)                   # (4*N*Ho*Wo,)
    v = jnp.take(xf, flat, axis=0).reshape(4, N, Ho, Wo, C)
    w = (wts * valid.astype(jnp.float32))[..., None]
    return jnp.sum(v * w, axis=0)


# ---------------------------------------------------------------------------
# DeformConv forward: deformable conv -> (folded) BN -> ReLU
# ---------------------------------------------------------------------------
def deform_conv_forward(params, x_nchw, *, use_pallas=True):
    mm = matmul_bias_act if use_pallas else _matmul_bias_act_ref
    x = jnp.transpose(x_nchw, (0, 2, 3, 1)).astype(jnp.float32)   # NHWC, f32 for sampling
    N, H, W, Cin = x.shape
    KS, pad, stride, dil = 3, 1, 1, 1
    Ho, Wo = H, W                                                 # s=1, p=1
    M = N * Ho * Wo

    # 1) offsets + modulation mask: single 27-channel 3x3 conv (Pallas matmul).
    #    Patches are written as a single bf16 HBM stream; 2*sigmoid is fused
    #    into the kernel epilogue over the mask columns.
    # NOTE: im2col K ordering is tap-major/channel-minor; loading real PyTorch
    #       (Cout, Cin, KH, KW) weights would need a K-axis permutation.
    p = extract_patches_3x3(x, pad).astype(jnp.bfloat16).reshape(M, KS * KS * Cin)
    om = mm(p, params["w_om"], params["b_om"],
            epilogue="offset_mask", mask_lo=2 * KS * KS, mask_hi=3 * KS * KS)
    om = om.reshape(N, Ho, Wo, 3 * KS * KS)
    off = om[..., : 2 * KS * KS]                  # (N,Ho,Wo,18), f32
    mask = om[..., 2 * KS * KS:]                  # (N,Ho,Wo,9) = 2*sigmoid(logits) (DCNv2 style)

    # 2) deformable bilinear sampling, modulated per tap; samples emitted in bf16.
    hh = jnp.arange(Ho, dtype=jnp.float32)[:, None]               # (Ho,1)
    ww = jnp.arange(Wo, dtype=jnp.float32)[None, :]               # (1,Wo)
    taps = []
    for i in range(KS):
        for j in range(KS):
            k = i * KS + j
            py = hh * stride - pad + i * dil + off[..., 2 * k]
            px = ww * stride - pad + j * dil + off[..., 2 * k + 1]
            v = bilinear_sample(x, py, px)                        # (N,Ho,Wo,Cin)
            taps.append((v * mask[..., k:k + 1]).astype(jnp.bfloat16))
    s2 = jnp.stack(taps, axis=3).reshape(M, KS * KS * Cin)

    # 3) main conv with BN scale folded into weights, bias + ReLU fused (Pallas)
    y = mm(s2, params["w_main_folded"], params["b_main_folded"], epilogue="relu")
    y = y.reshape(N, Ho, Wo, -1)
    return jnp.transpose(y, (0, 3, 1, 2))                         # back to NCHW


# ---------------------------------------------------------------------------
# Parameter construction (inference-form BN folded into weights/bias)
# ---------------------------------------------------------------------------
def build_deform_conv_params(key, chi, cho):
    k1, k2, k3 = jax.random.split(key, 3)
    KS = 3
    kk = KS * KS

    # Offset/mask conv.  The reference impl zero-inits these; small random
    # weights here so the bilinear sampling path is exercised non-trivially.
    w_om = jax.random.normal(k1, (kk * chi, 3 * kk), jnp.float32) * 0.05
    b_om = jnp.zeros((3 * kk,), jnp.float32)

    # Regular 3x3 conv (kaiming-ish) + bias.
    w = jax.random.normal(k2, (kk * chi, cho), jnp.float32) * (2.0 / (kk * chi)) ** 0.5
    conv_b = jax.random.normal(k3, (cho,), jnp.float32) * 0.01

    # BatchNorm2d(cho) at fresh init, evaluated in inference form and folded.
    gamma = jnp.ones((cho,), jnp.float32)
    beta = jnp.zeros((cho,), jnp.float32)
    mean = jnp.zeros((cho,), jnp.float32)
    var = jnp.ones((cho,), jnp.float32)
    scale = gamma / jnp.sqrt(var + _BN_EPS)

    return {
        "w_om": w_om,
        "b_om": b_om,
        "w_main_folded": w * scale[None, :],          # fold BN scale into weights
        "b_main_folded": beta + (conv_b - mean) * scale,
    }


# ---------------------------------------------------------------------------
# Demo
# ---------------------------------------------------------------------------
if __name__ == "__main__":
    key = jax.random.PRNGKey(0)
    pkey, xkey = jax.random.split(key)

    chi, cho = 4, 8
    params = build_deform_conv_params(pkey, chi, cho)
    x = jax.random.normal(xkey, (2, chi, 16, 16), jnp.float32)    # NCHW

    fwd = jax.jit(deform_conv_forward, static_argnames=("use_pallas",))

    out = jax.block_until_ready(fwd(params, x, use_pallas=True))
    assert out.shape == (2, cho, 16, 16), out.shape
    assert out.dtype == jnp.float32
    assert bool(jnp.all(jnp.isfinite(out)))

    # correctness vs pure-JAX f32-matmul reference (same bf16 source data)
    ref = jax.block_until_ready(fwd(params, x, use_pallas=False))
    rel = float(jnp.max(jnp.abs(out - ref)) / (jnp.max(jnp.abs(ref)) + 1e-6))
    assert rel < 5e-2, rel

    print("KERNEL_OK")
</pallas_src>

<mosaic_0001>
module attributes {stable_mosaic.version = 11 : i64} {
  func.func @_mm_bias_kernel(%arg0: i32, %arg1: i32, %arg2: memref<256x36xbf16, #tpu.memory_space<vmem>>, %arg3: memref<36x128xbf16, #tpu.memory_space<vmem>>, %arg4: memref<1x128xf32, #tpu.memory_space<vmem>>, %arg5: memref<256x128xf32, #tpu.memory_space<vmem>>) attributes {dimension_semantics = [#tpu.dimension_semantics<parallel>, #tpu.dimension_semantics<parallel>], iteration_bounds = array<i64: 2, 1>, scalar_prefetch = 0 : i64, scratch_operands = 0 : i64, tpu.core_type = #tpu.core_type<tc>, window_params = [{transform_indices = @transform_0, window_bounds = array<i64: 256, 36>}, {transform_indices = @transform_1, window_bounds = array<i64: 36, 128>}, {transform_indices = @transform_2, window_bounds = array<i64: 1, 128>}, {transform_indices = @transform_3, window_bounds = array<i64: 256, 128>}]} {
    %c0 = arith.constant 0 : index
    %c0_0 = arith.constant 0 : index
    %0 = vector.load %arg2[%c0, %c0_0] : memref<256x36xbf16, #tpu.memory_space<vmem>>, vector<256x36xbf16>
    %c0_1 = arith.constant 0 : index
    %c0_2 = arith.constant 0 : index
    %1 = vector.load %arg3[%c0_1, %c0_2] : memref<36x128xbf16, #tpu.memory_space<vmem>>, vector<36x128xbf16>
    %cst = arith.constant dense<0.000000e+00> : vector<256x128xf32>
    %2 = tpu.matmul %0, %1, %cst {dimension_numbers = #tpu.dot_dimension_numbers<[1], [0], [0], [1], [0, 0, 1, 1], [], []>} : vector<256x36xbf16>, vector<36x128xbf16>, vector<256x128xf32> -> vector<256x128xf32>
    %c0_3 = arith.constant 0 : index
    %c0_4 = arith.constant 0 : index
    %3 = vector.load %arg4[%c0_3, %c0_4] : memref<1x128xf32, #tpu.memory_space<vmem>>, vector<1x128xf32>
    %4 = vector.broadcast %3 : vector<1x128xf32> to vector<256x128xf32>
    %5 = arith.addf %2, %4 : vector<256x128xf32>
    %6 = tpu.iota {dimensions = array<i32: 1>} : vector<256x128xi32>
    %c18_i32 = arith.constant 18 : i32
    %7 = vector.broadcast %c18_i32 : i32 to vector<256x128xi32>
    %8 = arith.cmpi sge, %6, %7 : vector<256x128xi32>
    %c27_i32 = arith.constant 27 : i32
    %9 = vector.broadcast %c27_i32 : i32 to vector<256x128xi32>
    %10 = arith.cmpi slt, %6, %9 : vector<256x128xi32>
    %11 = arith.andi %8, %10 : vector<256x128xi1>
    %12 = arith.negf %5 : vector<256x128xf32>
    %13 = math.exp %12 : vector<256x128xf32>
    %cst_5 = arith.constant 1.000000e+00 : f32
    %14 = vector.broadcast %cst_5 : f32 to vector<256x128xf32>
    %15 = arith.addf %14, %13 : vector<256x128xf32>
    %16 = arith.divf %14, %15 : vector<256x128xf32>
    %cst_6 = arith.constant 2.000000e+00 : f32
    %17 = vector.broadcast %cst_6 : f32 to vector<256x128xf32>
    %18 = arith.mulf %17, %16 : vector<256x128xf32>
    %19 = arith.select %11, %18, %5 : vector<256x128xi1>, vector<256x128xf32>
    %c0_7 = arith.constant 0 : index
    %c0_8 = arith.constant 0 : index
    %20 = vector.load %arg5[%c0_7, %c0_8] : memref<256x128xf32, #tpu.memory_space<vmem>>, vector<256x128xf32>
    tpu.vector_store %arg5[%c0_7, %c0_8], %19 {strides = array<i32>} : memref<256x128xf32, #tpu.memory_space<vmem>>, vector<256x128xf32>,
    return
  }
  func.func @transform_0(%arg0: i32, %arg1: i32) -> (i32, i32) {
    %c0_i32 = arith.constant 0 : i32
    %c0_i32_0 = arith.constant 0 : i32
    return %arg0, %c0_i32 : i32, i32
  }
  func.func @transform_1(%arg0: i32, %arg1: i32) -> (i32, i32) {
    %c0_i32 = arith.constant 0 : i32
    %c0_i32_0 = arith.constant 0 : i32
    return %c0_i32, %arg1 : i32, i32
  }
  func.func @transform_2(%arg0: i32, %arg1: i32) -> (i32, i32) {
    %c0_i32 = arith.constant 0 : i32
    %c0_i32_0 = arith.constant 0 : i32
    return %c0_i32, %arg1 : i32, i32
  }
  func.func @transform_3(%arg0: i32, %arg1: i32) -> (i32, i32) {
    %c0_i32 = arith.constant 0 : i32
    return %arg0, %arg1 : i32, i32
  }
}

module attributes {stable_mosaic.version = 11 : i64} {
  func.func @_mm_bias_kernel(%arg0: i32, %arg1: i32, %arg2: memref<256x36xbf16, #tpu.memory_space<vmem>>, %arg3: memref<36x128xbf16, #tpu.memory_space<vmem>>, %arg4: memref<1x128xf32, #tpu.memory_space<vmem>>, %arg5: memref<256x128xf32, #tpu.memory_space<vmem>>) attributes {dimension_semantics = [#tpu.dimension_semantics<parallel>, #tpu.dimension_semantics<parallel>], iteration_bounds = array<i64: 2, 1>, scalar_prefetch = 0 : i64, scratch_operands = 0 : i64, tpu.core_type = #tpu.core_type<tc>, window_params = [{transform_indices = @transform_0, window_bounds = array<i64: 256, 36>}, {transform_indices = @transform_1, window_bounds = array<i64: 36, 128>}, {transform_indices = @transform_2, window_bounds = array<i64: 1, 128>}, {transform_indices = @transform_3, window_bounds = array<i64: 256, 128>}]} {
    %c0 = arith.constant 0 : index
    %c0_0 = arith.constant 0 : index
    %0 = vector.load %arg2[%c0, %c0_0] : memref<256x36xbf16, #tpu.memory_space<vmem>>, vector<256x36xbf16>
    %c0_1 = arith.constant 0 : index
    %c0_2 = arith.constant 0 : index
    %1 = vector.load %arg3[%c0_1, %c0_2] : memref<36x128xbf16, #tpu.memory_space<vmem>>, vector<36x128xbf16>
    %cst = arith.constant dense<0.000000e+00> : vector<256x128xf32>
    %2 = tpu.matmul %0, %1, %cst {dimension_numbers = #tpu.dot_dimension_numbers<[1], [0], [0], [1], [0, 0, 1, 1], [], []>} : vector<256x36xbf16>, vector<36x128xbf16>, vector<256x128xf32> -> vector<256x128xf32>
    %c0_3 = arith.constant 0 : index
    %c0_4 = arith.constant 0 : index
    %3 = vector.load %arg4[%c0_3, %c0_4] : memref<1x128xf32, #tpu.memory_space<vmem>>, vector<1x128xf32>
    %4 = vector.broadcast %3 : vector<1x128xf32> to vector<256x128xf32>
    %5 = arith.addf %2, %4 : vector<256x128xf32>
    %cst_5 = arith.constant 0.000000e+00 : f32
    %6 = vector.broadcast %cst_5 : f32 to vector<256x128xf32>
    %7 = arith.maximumf %5, %6 : vector<256x128xf32>
    %c0_6 = arith.constant 0 : index
    %c0_7 = arith.constant 0 : index
    %8 = vector.load %arg5[%c0_6, %c0_7] : memref<256x128xf32, #tpu.memory_space<vmem>>, vector<256x128xf32>
    tpu.vector_store %arg5[%c0_6, %c0_7], %7 {strides = array<i32>} : memref<256x128xf32, #tpu.memory_space<vmem>>, vector<256x128xf32>,
    return
  }
  func.func @transform_0(%arg0: i32, %arg1: i32) -> (i32, i32) {
    %c0_i32 = arith.constant 0 : i32
    %c0_i32_0 = arith.constant 0 : i32
    return %arg0, %c0_i32 : i32, i32
  }
  func.func @transform_1(%arg0: i32, %arg1: i32) -> (i32, i32) {
    %c0_i32 = arith.constant 0 : i32
    %c0_i32_0 = arith.constant 0 : i32
    return %c0_i32, %arg1 : i32, i32
  }
  func.func @transform_2(%arg0: i32, %arg1: i32) -> (i32, i32) {
    %c0_i32 = arith.constant 0 : i32
    %c0_i32_0 = arith.constant 0 : i32
    return %c0_i32, %arg1 : i32, i32
  }
  func.func @transform_3(%arg0: i32, %arg1: i32) -> (i32, i32) {
    %c0_i32 = arith.constant 0 : i32
    return %arg0, %arg1 : i32, i32
  }
}

</mosaic_0001>

<llo_original>
// kernel: deform_conv_forward.2
$region0: #{deform_conv_forward.2}
  #allocation0 [shape = 'u32[]', space=smem, size = 0x4, offset = 0x4, fixed_abs, tag = 'smem constant byte address 0x4 - core index']
  #allocation1 [shape = 'u32[144,128]{1,0:T(1,128)}', space=vmem, size = 0x12000, scoped, tag = 'internal scratch']
  %s0 = inlined_call_operand.vmem [shape: bf16[512,36], index: 0, kind: input, shape index: {}]
  %s1 = inlined_call_operand.vmem [shape: bf16[36,128], index: 1, kind: input, shape index: {}]
  %s2 = inlined_call_operand.vmem [shape: f32[1,128], index: 2, kind: input, shape index: {}]
  %s3 = inlined_call_operand.vmem [shape: f32[512,128], index: 3, kind: output, shape index: {}]
  %s4 = sld [smem:[#allocation0]]
  $region45: #{deform_conv_forward.2} parent=0
    _
  %s6 = ssub.s32 1, %s4
  %s7 = scalar_select 0, %s6, %s4
  loop: start=0, step=1, limit=4
  $region2: #{deform_conv_forward.2} parent=0 // loop_pre_header
    _
  $region3: #{deform_conv_forward.2} parent=0 // loop_header
    %s9 = sphi 0, %s13
    %p10 = scmp.ge.s32.totalorder %s9, 4
    %s16 = sphi 0, %s28
    %s17 = sphi 0, %s24
    %s18 = sphi 0, %s16
    %s19 = sphi 0, %s17
    %s20 = sphi 0, %s18
    %s21 = sphi 0, %s19
    %s31 = sphi 0, %s33
    %s34 = sphi 0, %s31
    %s35 = sphi 0, %s34
    %s51 = sphi 0, %s35
    %s57 = sphi 0, %s59
    %s60 = sphi 0, %s57
    %s61 = sphi 0, %s60
    %s77 = sphi 0, %s61
    %s83 = sphi 0, %s85
    %s86 = sphi 0, %s83
    %s87 = sphi 0, %s86
    %s103 = sphi 0, %s87
    %s111 = sphi 0, %s113
    %s114 = sphi 0, %s111
    %s115 = sphi 0, %s114
    %s131 = sphi 0, %s115
  $region4: #{deform_conv_forward.2} parent=0 // loop_header_branch
    %12 = sbr.rel (%p10) target = $region8
  $region5: #{deform_conv_forward.2} parent=0 // loop_body
    %s14 = ssub.s32 %s9, 1
    %s15 = ssub.s32 %s9, 2
    %s22 = sadd.s32 1, %s17
    %p23 = scmp.ge.s32.totalorder %s22, 1
    %s24 = scalar_select %p23, 0, %s22
    %s25 = sadd.s32 1, %s16
    %s26 = scalar_select %p23, %s25, %s16
    %p27 = scmp.ge.s32.totalorder %s26, 2
    %s28 = scalar_select %p27, 0, %s26
    %s29 = ssub.s32 %s16, %s28
    %p30 = scmp.eq.s32.totalorder %s29, 0
    %s32 = sadd.s32 %s31, 1
    %s33 = scalar_select %p30, %s31, %s32
    %p36 = pneg %p30
    %p37 = scmp.eq.s32.totalorder %s9, 1
    %p38 = por %p36, %p37
    %p39 = scmp.ne.s32.totalorder %s31, %s34
    %p40 = scmp.eq.s32.totalorder %s9, 0
    %p41 = por %p39, %p40
    %p42 = scmp.ne.s32.totalorder %s31, %s34
    %p43 = scmp.eq.s32.totalorder %s14, 1
    %p44 = por %p42, %p43
    %p45 = scmp.ne.s32.totalorder %s34, %s35
    %p46 = scmp.eq.s32.totalorder %s14, 0
    %p47 = por %p45, %p46
    %p48 = scmp.ne.s32.totalorder %s34, %s35
    %p49 = scmp.eq.s32.totalorder %s15, 1
    %p50 = por %p48, %p49
    %p52 = scmp.ne.s32.totalorder %s35, %s51
    %p53 = scmp.eq.s32.totalorder %s15, 0
    %p54 = por %p52, %p53
    %s55 = ssub.s32 %s17, %s24
    %p56 = scmp.eq.s32.totalorder %s55, 0
    %s58 = sadd.s32 %s57, 1
    %s59 = scalar_select %p56, %s57, %s58
    %p62 = pneg %p56
    %p63 = scmp.eq.s32.totalorder %s9, 1
    %p64 = por %p62, %p63
    %p65 = scmp.ne.s32.totalorder %s57, %s60
    %p66 = scmp.eq.s32.totalorder %s9, 0
    %p67 = por %p65, %p66
    %p68 = scmp.ne.s32.totalorder %s57, %s60
    %p69 = scmp.eq.s32.totalorder %s14, 1
    %p70 = por %p68, %p69
    %p71 = scmp.ne.s32.totalorder %s60, %s61
    %p72 = scmp.eq.s32.totalorder %s14, 0
    %p73 = por %p71, %p72
    %p74 = scmp.ne.s32.totalorder %s60, %s61
    %p75 = scmp.eq.s32.totalorder %s15, 1
    %p76 = por %p74, %p75
    %p78 = scmp.ne.s32.totalorder %s61, %s77
    %p79 = scmp.eq.s32.totalorder %s15, 0
    %p80 = por %p78, %p79
    %s81 = ssub.s32 %s17, %s24
    %p82 = scmp.eq.s32.totalorder %s81, 0
    %s84 = sadd.s32 %s83, 1
    %s85 = scalar_select %p82, %s83, %s84
    %p88 = pneg %p82
    %p89 = scmp.eq.s32.totalorder %s9, 1
    %p90 = por %p88, %p89
    %p91 = scmp.ne.s32.totalorder %s83, %s86
    %p92 = scmp.eq.s32.totalorder %s9, 0
    %p93 = por %p91, %p92
    %p94 = scmp.ne.s32.totalorder %s83, %s86
    %p95 = scmp.eq.s32.totalorder %s14, 1
    %p96 = por %p94, %p95
    %p97 = scmp.ne.s32.totalorder %s86, %s87
    %p98 = scmp.eq.s32.totalorder %s14, 0
    %p99 = por %p97, %p98
    %p100 = scmp.ne.s32.totalorder %s86, %s87
    %p101 = scmp.eq.s32.totalorder %s15, 1
    %p102 = por %p100, %p101
    %p104 = scmp.ne.s32.totalorder %s87, %s103
    %p105 = scmp.eq.s32.totalorder %s15, 0
    %p106 = por %p104, %p105
    %s107 = ssub.s32 %s16, %s28
    %s108 = ssub.s32 %s17, %s24
    %s109 = sor.u32 %s107, %s108
    %p110 = scmp.eq.s32.totalorder %s109, 0
    %s112 = sadd.s32 %s111, 1
    %s113 = scalar_select %p110, %s111, %s112
    %p116 = pneg %p110
    %p117 = scmp.eq.s32.totalorder %s9, 1
    %p118 = por %p116, %p117
    %p119 = scmp.ne.s32.totalorder %s111, %s114
    %p120 = scmp.eq.s32.totalorder %s9, 0
    %p121 = por %p119, %p120
    %p122 = scmp.ne.s32.totalorder %s111, %s114
    %p123 = scmp.eq.s32.totalorder %s14, 1
    %p124 = por %p122, %p123
    %p125 = scmp.ne.s32.totalorder %s114, %s115
    %p126 = scmp.eq.s32.totalorder %s14, 0
    %p127 = por %p125, %p126
    %p128 = scmp.ne.s32.totalorder %s114, %s115
    %p129 = scmp.eq.s32.totalorder %s15, 1
    %p130 = por %p128, %p129
    %p132 = scmp.ne.s32.totalorder %s115, %s131
    %p133 = scmp.eq.s32.totalorder %s15, 0
    %p134 = por %p132, %p133
    %p135 = scmp.le.s32.totalorder 1, %s9
    %p136 = scmp.lt.s32.totalorder %s9, 3
    %p137 = pnand %p135, %p136
    %p138 = pneg %p137
    // Predicated region
    $region9: #{deform_conv_forward.2} parent=5 // pred_check
      _
    $region10: #{deform_conv_forward.2} parent=5 // pred_check_branch
      %140 = sbr.rel (%p137) target = $region12
    $region11: #{deform_conv_forward.2} parent=5 // pred_region
      %s141 = ssub.s32 %s9, 1
      // Predicated region
      $region13: #{deform_conv_forward.2} parent=11 // pred_check
        %p142 = pneg %p73
      $region14: #{deform_conv_forward.2} parent=11 // pred_check_branch
        %144 = sbr.rel (%p142) target = $region16
      $region15: #{deform_conv_forward.2} parent=11 // pred_region
        %p145 = scmp.lt.s32.totalorder %s19, 0
        %s146 = scalar_select %p145, %s19, 0
        %s147 = smul.addr %s146, 4
        %s148 = scalar_lea.vmem %s1, %s147
      $region16: #{deform_conv_forward.2} parent=11 // pred_fallthru
        _
      // Predicated region
      $region17: #{deform_conv_forward.2} parent=11 // pred_check
        %p149 = pneg %p99
      $region18: #{deform_conv_forward.2} parent=11 // pred_check_branch
        %151 = sbr.rel (%p149) target = $region20
      $region19: #{deform_conv_forward.2} parent=11 // pred_region
        %p152 = scmp.lt.s32.totalorder %s19, 0
        %s153 = scalar_select %p152, %s19, 0
        %s154 = scalar_lea.vmem %s2, %s153
      $region20: #{deform_conv_forward.2} parent=11 // pred_fallthru
        _
    $region12: #{deform_conv_forward.2} parent=5 // pred_fallthru
      _
    %p155 = scmp.lt.s32.totalorder %s9, 2
    // Predicated region
    $region21: #{deform_conv_forward.2} parent=5 // pred_check
      %p156 = pneg %p155
    $region22: #{deform_conv_forward.2} parent=5 // pred_check_branch
      %158 = sbr.rel (%p156) target = $region24
    $region23: #{deform_conv_forward.2} parent=5 // pred_region
      // Predicated region
      $region25: #{deform_conv_forward.2} parent=23 // pred_check
        %p159 = pneg %p41
      $region26: #{deform_conv_forward.2} parent=23 // pred_check_branch
        %161 = sbr.rel (%p159) target = $region28
      $region27: #{deform_conv_forward.2} parent=23 // pred_region
        %s162 = smul.u32 32, %s16
        %p163 = scmp.lt.s32.totalorder %s162, 63
        %s164 = scalar_select %p163, %s162, 63
        %s165 = smul.addr %s164, 4
        %s166 = scalar_lea.vmem %s0, %s165
        %s167 = smul.u32 32, %s16
      $region28: #{deform_conv_forward.2} parent=23 // pred_fallthru
        _
    $region24: #{deform_conv_forward.2} parent=5 // pred_fallthru
      _
    %p168 = scmp.le.s32.totalorder 1, %s9
    %p169 = scmp.lt.s32.totalorder %s9, 3
    %p170 = pnand %p168, %p169
    %p171 = pneg %p170
    // Predicated region
    $region29: #{deform_conv_forward.2} parent=5 // pred_check
      _
    $region30: #{deform_conv_forward.2} parent=5 // pred_check_branch
      %173 = sbr.rel (%p170) target = $region32
    $region31: #{deform_conv_forward.2} parent=5 // pred_region
      %s174 = ssub.s32 %s9, 1
      %s175 = smul.u32 32, %s18
      %p176 = scmp.lt.s32.totalorder %s175, 63
      %s177 = scalar_select %p176, %s175, 63
      %s178 = smul.addr %s177, 4
      %s179 = scalar_lea.vmem %s0, %s178
      %p180 = pneg %p47
      %p181 = pneg %p44
      %p182 = scmp.lt.s32.totalorder %s19, 0
      %s183 = scalar_select %p182, %s19, 0
      %s184 = smul.addr %s183, 4
      %s185 = scalar_lea.vmem %s1, %s184
      %p186 = pneg %p73
      %p187 = pneg %p70
      %p188 = scmp.lt.s32.totalorder %s19, 0
      %s189 = scalar_select %p188, %s19, 0
      %s190 = scalar_lea.vmem %s2, %s189
      %p191 = pneg %p99
      %p192 = pneg %p96
      %p193 = pneg %p127
      %p194 = pneg %p124
      %s195 = smul.u32 32, %s18
      %p196 = scmp.lt.s32.totalorder %s195, 63
      %s197 = scalar_select %p196, %s195, 63
      %p198 = scmp.lt.s32.totalorder %s19, 0
      %s199 = scalar_select %p198, %s19, 0
      %s200 = sadd.s32 %s199, %s197
      %s201 = smul.addr %s200, 8
      %s202 = scalar_lea.vmem %s3, %s201
      %s203 = smul.u32 32, %s18
      %p204 = scmp.lt.s32.totalorder %s203, 63
      %s205 = scalar_select %p204, %s203, 63
      %s206 = smul.addr %s205, 4
      %s207 = scalar_lea.vmem %s0, %s206
      %s208 = smul.u32 32, %s18
      %p209 = scmp.lt.s32.totalorder %s19, 0
      %s210 = scalar_select %p209, %s19, 0
      %s211 = smul.addr %s210, 4
      %s212 = scalar_lea.vmem %s1, %s211
      %p213 = scmp.lt.s32.totalorder %s19, 0
      %s214 = scalar_select %p213, %s19, 0
      %s215 = scalar_lea.vmem %s2, %s214
      %s216 = smul.u32 32, %s18
      %p217 = scmp.lt.s32.totalorder %s216, 63
      %s218 = scalar_select %p217, %s216, 63
      %p219 = scmp.lt.s32.totalorder %s19, 0
      %s220 = scalar_select %p219, %s19, 0
      %s221 = sadd.s32 %s220, %s218
      %s222 = smul.addr %s221, 8
      %s223 = scalar_lea.vmem %s3, %s222
      %s224 = smul.u32 32, %s18
      %v226 = vld [vmem:[%s207] sm:$0xf]
      %v227 = vld [vmem:[%s207 + $0x4] sm:$0xf]
      %v228 = vld [vmem:[%s207 + $0x8] sm:$0xf]
      %v229 = vld [vmem:[%s207 + $0xc] sm:$0xf]
      %v230 = vld [vmem:[%s207 + $0x10] sm:$0xf]
      %v231 = vld [vmem:[%s207 + $0x14] sm:$0xf]
      %v232 = vld [vmem:[%s207 + $0x18] sm:$0xf]
      %v233 = vld [vmem:[%s207 + $0x1c] sm:$0xf]
      %v234 = vld [vmem:[%s207 + $0x20] sm:$0xf]
      %v235 = vld [vmem:[%s207 + $0x24] sm:$0xf]
      %v236 = vld [vmem:[%s207 + $0x28] sm:$0xf]
      %v237 = vld [vmem:[%s207 + $0x2c] sm:$0xf]
      %v238 = vld [vmem:[%s207 + $0x30] sm:$0xf]
      %v239 = vld [vmem:[%s207 + $0x34] sm:$0xf]
      %v240 = vld [vmem:[%s207 + $0x38] sm:$0xf]
      %v241 = vld [vmem:[%s207 + $0x3c] sm:$0xf]
      %v242 = vld [vmem:[%s207 + $0x40] sm:$0xf]
      %v243 = vld [vmem:[%s207 + $0x44] sm:$0xf]
      %v244 = vld [vmem:[%s207 + $0x48] sm:$0xf]
      %v245 = vld [vmem:[%s207 + $0x4c] sm:$0xf]
      %v246 = vld [vmem:[%s207 + $0x50] sm:$0xf]
      %v247 = vld [vmem:[%s207 + $0x54] sm:$0xf]
      %v248 = vld [vmem:[%s207 + $0x58] sm:$0xf]
      %v249 = vld [vmem:[%s207 + $0x5c] sm:$0xf]
      %v250 = vld [vmem:[%s207 + $0x60] sm:$0xf]
      %v251 = vld [vmem:[%s207 + $0x64] sm:$0xf]
      %v252 = vld [vmem:[%s207 + $0x68] sm:$0xf]
      %v253 = vld [vmem:[%s207 + $0x6c] sm:$0xf]
      %v254 = vld [vmem:[%s207 + $0x70] sm:$0xf]
      %v255 = vld [vmem:[%s207 + $0x74] sm:$0xf]
      %v256 = vld [vmem:[%s207 + $0x78] sm:$0xf]
      %v257 = vld [vmem:[%s207 + $0x7c] sm:$0xf]
      %v258 = vld [vmem:[%s212] sm:$0xf]
      %v259 = vld [vmem:[%s212 + $0x4] sm:$0xf]
      %v260 = vld [vmem:[%s212 + $0x8] sm:$0xf]
      %v261 = vld [vmem:[%s212 + $0xc] sm:$0xf]
      %v262 = vld [vmem:[%s212 + $0x10] sm:$0x3]
      %v263 = vld [vmem:[%s215] sm:$0x1]
      %v265 = vlaneseq
      %v266 = vshrl.u32 %v265, 7
      %v267 = vsub.s32 0, %v266
      %v268 = vrot.slane %v263, %v267
      %v302 = vunpack.c.l.b16 %v226
      %v303 = vunpack.c.l.b16 %v227
      %v304 = vunpack.c.l.b16 %v228
      %v305 = vunpack.c.l.b16 %v229
      %v306 = vunpack.c.l.b16 %v230
      %v307 = vunpack.c.l.b16 %v231
      %v308 = vunpack.c.l.b16 %v232
      %v309 = vunpack.c.l.b16 %v233
      %v310 = vunpack.c.l.b16 %v234
      %v311 = vunpack.c.l.b16 %v235
      %v312 = vunpack.c.l.b16 %v236
      %v313 = vunpack.c.l.b16 %v237
      %v314 = vunpack.c.l.b16 %v238
      %v315 = vunpack.c.l.b16 %v239
      %v316 = vunpack.c.l.b16 %v240
      %v317 = vunpack.c.l.b16 %v241
      %v318 = vunpack.c.l.b16 %v242
      %v319 = vunpack.c.l.b16 %v243
      %v320 = vunpack.c.l.b16 %v244
      %v321 = vunpack.c.l.b16 %v245
      %v322 = vunpack.c.l.b16 %v246
      %v323 = vunpack.c.l.b16 %v247
      %v324 = vunpack.c.l.b16 %v248
      %v325 = vunpack.c.l.b16 %v249
      %v326 = vunpack.c.l.b16 %v250
      %v327 = vunpack.c.l.b16 %v251
      %v328 = vunpack.c.l.b16 %v252
      %v329 = vunpack.c.l.b16 %v253
      %v330 = vunpack.c.l.b16 %v254
      %v331 = vunpack.c.l.b16 %v255
      %v332 = vunpack.c.l.b16 %v256
      %v333 = vunpack.c.l.b16 %v257
      %v334 = vpack.c.b16 %v303, %v302
      %v335 = vpack.c.b16 %v305, %v304
      %v336 = vpack.c.b16 %v307, %v306
      %v337 = vpack.c.b16 %v309, %v308
      %v338 = vpack.c.b16 %v311, %v310
      %v339 = vpack.c.b16 %v313, %v312
      %v340 = vpack.c.b16 %v315, %v314
      %v341 = vpack.c.b16 %v317, %v316
      %v342 = vpack.c.b16 %v319, %v318
      %v343 = vpack.c.b16 %v321, %v320
      %v344 = vpack.c.b16 %v323, %v322
      %v345 = vpack.c.b16 %v325, %v324
      %v346 = vpack.c.b16 %v327, %v326
      %v347 = vpack.c.b16 %v329, %v328
      %v348 = vpack.c.b16 %v331, %v330
      %v349 = vpack.c.b16 %v333, %v332
      %v355 = vunpack.c.l.b16 %v258
      %v356 = vunpack.c.l.b16 %v259
      %v357 = vunpack.c.l.b16 %v260
      %v358 = vunpack.c.l.b16 %v261
      %v359 = vunpack.c.l.b16 %v262
      %v360 = vpack.c.b16 %v356, %v355
      %v361 = vpack.c.b16 %v358, %v357
      %v362 = vpack.c.b16 %v359, %v359
      %vm365 = vcmask 293888
      %v367 = vsel %vm365, %v334, 0
      %v370 = vsel %vm365, %v335, 0
      %v373 = vsel %vm365, %v336, 0
      %v376 = vsel %vm365, %v337, 0
      %v379 = vsel %vm365, %v338, 0
      %v382 = vsel %vm365, %v339, 0
      %v385 = vsel %vm365, %v340, 0
      %v388 = vsel %vm365, %v341, 0
      %v391 = vsel %vm365, %v342, 0
      %v394 = vsel %vm365, %v343, 0
      %v397 = vsel %vm365, %v344, 0
      %v400 = vsel %vm365, %v345, 0
      %v403 = vsel %vm365, %v346, 0
      %v406 = vsel %vm365, %v347, 0
      %v409 = vsel %vm365, %v348, 0
      %v412 = vsel %vm365, %v349, 0
      %vm414 = vcmask 1041408
      %v416 = vsel %vm414, %v362, 0
      %418 = vmatprep.subr.bf16.mxu0 0
      %419 = vmatpush1.bf16.msra.mxu0 %v360
      %420 = vmatprep.subr.bf16.mxu0 0
      %421 = vmatpush1.bf16.msra.mxu0 %v361
      %422 = vmatprep.subr.bf16.mxu0 0
      %423 = vmatpush1.bf16.msra.mxu0 %v416
      %424 = vmatprep.subr.bf16.mxu0 0
      %425 = vmatpush1.bf16.msra.mxu0 0
      %426 = vmatprep.subr.bf16.mxu0 0
      %427 = vmatpush1.bf16.msra.mxu0 0
      %428 = vmatprep.subr.bf16.mxu0 0
      %429 = vmatpush1.bf16.msra.mxu0 0
      %430 = vmatprep.subr.bf16.mxu0 0
      %431 = vmatpush1.bf16.msra.mxu0 0
      %432 = vmatprep.subr.bf16.mxu0 0
      %433 = vmatpush1.bf16.msra.mxu0 0
      %434 = vmatprep.subr.bf16.mxu0 0
      %435 = vmatpush1.bf16.msra.mxu0 0
      %436 = vmatprep.subr.bf16.mxu0 0
      %437 = vmatpush1.bf16.msra.mxu0 0
      %438 = vmatprep.subr.bf16.mxu0 0
      %439 = vmatpush1.bf16.msra.mxu0 0
      %440 = vmatprep.subr.bf16.mxu0 0
      %441 = vmatpush1.bf16.msra.mxu0 0
      %442 = vmatprep.subr.bf16.mxu0 0
      %443 = vmatpush1.bf16.msra.mxu0 0
      %444 = vmatprep.subr.bf16.mxu0 0
      %445 = vmatpush1.bf16.msra.mxu0 0
      %446 = vmatprep.subr.bf16.mxu0 0
      %447 = vmatpush1.bf16.msra.mxu0 0
      %448 = vmatprep.subr.bf16.mxu0 0
      %449 = vmatpush1.bf16.msra.mxu0 0
      %450 = vmatprep.mubr.bf16.mxu0 0
      %451 = vmatmul.mubr.bf16.gmra.mrb[0].mxu0 %v367
      %v452 = vpop.f32.mrb[0].mxu0
      %v453 = vadd.f32 %v268, %v452
      %v454 = vpop.f32.mrb[0].mxu0
      %v455 = vpop.f32.mrb[0].mxu0
      %v456 = vadd.f32 %v268, %v455
      %v457 = vpop.f32.mrb[0].mxu0
      %458 = vmatprep.mubr.bf16.mxu0 0
      %459 = vmatmul.mubr.bf16.gmra.mrb[0].mxu0 %v370
      %v460 = vpop.f32.mrb[0].mxu0
      %v461 = vadd.f32 %v268, %v460
      %v462 = vpop.f32.mrb[0].mxu0
      %v463 = vpop.f32.mrb[0].mxu0
      %v464 = vadd.f32 %v268, %v463
      %v465 = vpop.f32.mrb[0].mxu0
      %466 = vmatprep.mubr.bf16.mxu0 0
      %467 = vmatmul.mubr.bf16.gmra.mrb[0].mxu0 %v373
      %v468 = vpop.f32.mrb[0].mxu0
      %v469 = vadd.f32 %v268, %v468
      %v470 = vpop.f32.mrb[0].mxu0
      %v471 = vpop.f32.mrb[0].mxu0
      %v472 = vadd.f32 %v268, %v471
      %v473 = vpop.f32.mrb[0].mxu0
      %474 = vmatprep.mubr.bf16.mxu0 0
      %475 = vmatmul.mubr.bf16.gmra.mrb[0].mxu0 %v376
      %v476 = vpop.f32.mrb[0].mxu0
      %v477 = vadd.f32 %v268, %v476
      %v478 = vpop.f32.mrb[0].mxu0
      %v479 = vpop.f32.mrb[0].mxu0
      %v480 = vadd.f32 %v268, %v479
      %v481 = vpop.f32.mrb[0].mxu0
      %482 = vmatprep.mubr.bf16.mxu0 0
      %483 = vmatmul.mubr.bf16.gmra.mrb[0].mxu0 %v379
      %v484 = vpop.f32.mrb[0].mxu0
      %v485 = vadd.f32 %v268, %v484
      %v486 = vpop.f32.mrb[0].mxu0
      %v487 = vpop.f32.mrb[0].mxu0
      %v488 = vadd.f32 %v268, %v487
      %v489 = vpop.f32.mrb[0].mxu0
      %490 = vmatprep.mubr.bf16.mxu0 0
      %491 = vmatmul.mubr.bf16.gmra.mrb[0].mxu0 %v382
      %v492 = vpop.f32.mrb[0].mxu0
      %v493 = vadd.f32 %v268, %v492
      %v494 = vpop.f32.mrb[0].mxu0
      %v495 = vpop.f32.mrb[0].mxu0
      %v496 = vadd.f32 %v268, %v495
      %v497 = vpop.f32.mrb[0].mxu0
      %498 = vmatprep.mubr.bf16.mxu0 0
      %499 = vmatmul.mubr.bf16.gmra.mrb[0].mxu0 %v385
      %v500 = vpop.f32.mrb[0].mxu0
      %v501 = vadd.f32 %v268, %v500
      %v502 = vpop.f32.mrb[0].mxu0
      %v503 = vpop.f32.mrb[0].mxu0
      %v504 = vadd.f32 %v268, %v503
      %v505 = vpop.f32.mrb[0].mxu0
      %506 = vmatprep.mubr.bf16.mxu0 0
      %507 = vmatmul.mubr.bf16.gmra.mrb[0].mxu0 %v388
      %v508 = vpop.f32.mrb[0].mxu0
      %v509 = vadd.f32 %v268, %v508
      %v510 = vpop.f32.mrb[0].mxu0
      %v511 = vpop.f32.mrb[0].mxu0
      %v512 = vadd.f32 %v268, %v511
      %v513 = vpop.f32.mrb[0].mxu0
      %514 = vmatprep.mubr.bf16.mxu0 0
      %515 = vmatmul.mubr.bf16.gmra.mrb[0].mxu0 %v391
      %v516 = vpop.f32.mrb[0].mxu0
      %v517 = vadd.f32 %v268, %v516
      %v518 = vpop.f32.mrb[0].mxu0
      %v519 = vpop.f32.mrb[0].mxu0
      %v520 = vadd.f32 %v268, %v519
      %v521 = vpop.f32.mrb[0].mxu0
      %522 = vmatprep.mubr.bf16.mxu0 0
      %523 = vmatmul.mubr.bf16.gmra.mrb[0].mxu0 %v394
      %v524 = vpop.f32.mrb[0].mxu0
      %v525 = vadd.f32 %v268, %v524
      %v526 = vpop.f32.mrb[0].mxu0
      %v527 = vpop.f32.mrb[0].mxu0
      %v528 = vadd.f32 %v268, %v527
      %v529 = vpop.f32.mrb[0].mxu0
      %530 = vmatprep.mubr.bf16.mxu0 0
      %531 = vmatmul.mubr.bf16.gmra.mrb[0].mxu0 %v397
      %v532 = vpop.f32.mrb[0].mxu0
      %v533 = vadd.f32 %v268, %v532
      %v534 = vpop.f32.mrb[0].mxu0
      %v535 = vpop.f32.mrb[0].mxu0
      %v536 = vadd.f32 %v268, %v535
      %v537 = vpop.f32.mrb[0].mxu0
      %538 = vmatprep.mubr.bf16.mxu0 0
      %539 = vmatmul.mubr.bf16.gmra.mrb[0].mxu0 %v400
      %v540 = vpop.f32.mrb[0].mxu0
      %v541 = vadd.f32 %v268, %v540
      %v542 = vpop.f32.mrb[0].mxu0
      %v543 = vpop.f32.mrb[0].mxu0
      %v544 = vadd.f32 %v268, %v543
      %v545 = vpop.f32.mrb[0].mxu0
      %546 = vmatprep.mubr.bf16.mxu0 0
      %547 = vmatmul.mubr.bf16.gmra.mrb[0].mxu0 %v403
      %v548 = vpop.f32.mrb[0].mxu0
      %v549 = vadd.f32 %v268, %v548
      %v550 = vpop.f32.mrb[0].mxu0
      %v551 = vpop.f32.mrb[0].mxu0
      %v552 = vadd.f32 %v268, %v551
      %v553 = vpop.f32.mrb[0].mxu0
      %554 = vmatprep.mubr.bf16.mxu0 0
      %555 = vmatmul.mubr.bf16.gmra.mrb[0].mxu0 %v406
      %v556 = vpop.f32.mrb[0].mxu0
      %v557 = vadd.f32 %v268, %v556
      %v558 = vpop.f32.mrb[0].mxu0
      %v559 = vpop.f32.mrb[0].mxu0
      %v560 = vadd.f32 %v268, %v559
      %v561 = vpop.f32.mrb[0].mxu0
      %562 = vmatprep.mubr.bf16.mxu0 0
      %563 = vmatmul.mubr.bf16.gmra.mrb[0].mxu0 %v409
      %v564 = vpop.f32.mrb[0].mxu0
      %v565 = vadd.f32 %v268, %v564
      %v566 = vpop.f32.mrb[0].mxu0
      %v567 = vpop.f32.mrb[0].mxu0
      %v568 = vadd.f32 %v268, %v567
      %v569 = vpop.f32.mrb[0].mxu0
      %570 = vmatprep.mubr.bf16.mxu0 0
      %571 = vmatmul.mubr.bf16.gmra.mrb[0].mxu0 %v412
      %v572 = vpop.f32.mrb[0].mxu0
      %v573 = vadd.f32 %v268, %v572
      %v574 = vpop.f32.mrb[0].mxu0
      %v575 = vpop.f32.mrb[0].mxu0
      %v576 = vadd.f32 %v268, %v575
      %v577 = vpop.f32.mrb[0].mxu0
      %578 = vdwg.mxu0
      %v579 = vlaneseq
      %v580 = vand.u32 %v579, 127
      %vm581 = vcmp.ge.s32.totalorder %v580, 18
      %vm582 = vcmp.lt.s32.totalorder %v580, 27
      %vm583 = vmand %vm581, %vm582
      %v584 = vxor.u32 %v453, 2147483648
      %v585 = vxor.u32 %v456, 2147483648
      %v586 = vxor.u32 %v461, 2147483648
      %v587 = vxor.u32 %v464, 2147483648
      %v588 = vxor.u32 %v469, 2147483648
      %v589 = vxor.u32 %v472, 2147483648
      %v590 = vxor.u32 %v477, 2147483648
      %v591 = vxor.u32 %v480, 2147483648
      %v592 = vxor.u32 %v485, 2147483648
      %v593 = vxor.u32 %v488, 2147483648
      %v594 = vxor.u32 %v493, 2147483648
      %v595 = vxor.u32 %v496, 2147483648
      %v596 = vxor.u32 %v501, 2147483648
      %v597 = vxor.u32 %v504, 2147483648
      %v598 = vxor.u32 %v509, 2147483648
      %v599 = vxor.u32 %v512, 2147483648
      %v600 = vxor.u32 %v517, 2147483648
      %v601 = vxor.u32 %v520, 2147483648
      %v602 = vxor.u32 %v525, 2147483648
      %v603 = vxor.u32 %v528, 2147483648
      %v604 = vxor.u32 %v533, 2147483648
      %v605 = vxor.u32 %v536, 2147483648
      %v606 = vxor.u32 %v541, 2147483648
      %v607 = vxor.u32 %v544, 2147483648
      %v608 = vxor.u32 %v549, 2147483648
      %v609 = vxor.u32 %v552, 2147483648
      %v610 = vxor.u32 %v557, 2147483648
      %v611 = vxor.u32 %v560, 2147483648
      %v612 = vxor.u32 %v565, 2147483648
      %v613 = vxor.u32 %v568, 2147483648
      %v614 = vxor.u32 %v573, 2147483648
      %v615 = vxor.u32 %v576, 2147483648
      %v616 = vmul.f32 %v584, 1.442695
      %v617 = vpow.pop %v616
      %v618 = vmul.f32 %v585, 1.442695
      %v619 = vpow.pop %v618
      %v620 = vmul.f32 %v586, 1.442695
      %v621 = vpow.pop %v620
      %v622 = vmul.f32 %v587, 1.442695
      %v623 = vpow.pop %v622
      %v624 = vmul.f32 %v588, 1.442695
      %v625 = vpow.pop %v624
      %v626 = vmul.f32 %v589, 1.442695
      %v627 = vpow.pop %v626
      %v628 = vmul.f32 %v590, 1.442695
      %v629 = vpow.pop %v628
      %v630 = vmul.f32 %v591, 1.442695
      %v631 = vpow.pop %v630
      %v632 = vmul.f32 %v592, 1.442695
      %v633 = vpow.pop %v632
      %v634 = vmul.f32 %v593, 1.442695
      %v635 = vpow.pop %v634
      %v636 = vmul.f32 %v594, 1.442695
      %v637 = vpow.pop %v636
      %v638 = vmul.f32 %v595, 1.442695
      %v639 = vpow.pop %v638
      %v640 = vmul.f32 %v596, 1.442695
      %v641 = vpow.pop %v640
      %v642 = vmul.f32 %v597, 1.442695
      %v643 = vpow.pop %v642
      %v644 = vmul.f32 %v598, 1.442695
      %v645 = vpow.pop %v644
      %v646 = vmul.f32 %v599, 1.442695
      %v647 = vpow.pop %v646
      %v648 = vmul.f32 %v600, 1.442695
      %v649 = vpow.pop %v648
      %v650 = vmul.f32 %v601, 1.442695
      %v651 = vpow.pop %v650
      %v652 = vmul.f32 %v602, 1.442695
      %v653 = vpow.pop %v652
      %v654 = vmul.f32 %v603, 1.442695
      %v655 = vpow.pop %v654
      %v656 = vmul.f32 %v604, 1.442695
      %v657 = vpow.pop %v656
      %v658 = vmul.f32 %v605, 1.442695
      %v659 = vpow.pop %v658
      %v660 = vmul.f32 %v606, 1.442695
      %v661 = vpow.pop %v660
      %v662 = vmul.f32 %v607, 1.442695
      %v663 = vpow.pop %v662
      %v664 = vmul.f32 %v608, 1.442695
      %v665 = vpow.pop %v664
      %v666 = vmul.f32 %v609, 1.442695
      %v667 = vpow.pop %v666
      %v668 = vmul.f32 %v610, 1.442695
      %v669 = vpow.pop %v668
      %v670 = vmul.f32 %v611, 1.442695
      %v671 = vpow.pop %v670
      %v672 = vmul.f32 %v612, 1.442695
      %v673 = vpow.pop %v672
      %v674 = vmul.f32 %v613, 1.442695
      %v675 = vpow.pop %v674
      %v676 = vmul.f32 %v614, 1.442695
      %v677 = vpow.pop %v676
      %v678 = vmul.f32 %v615, 1.442695
      %v679 = vpow.pop %v678
      %v680 = vadd.f32 %v617, 1.0
      %v681 = vadd.f32 %v619, 1.0
      %v682 = vadd.f32 %v621, 1.0
      %v683 = vadd.f32 %v623, 1.0
      %v684 = vadd.f32 %v625, 1.0
      %v685 = vadd.f32 %v627, 1.0
      %v686 = vadd.f32 %v629, 1.0
      %v687 = vadd.f32 %v631, 1.0
      %v688 = vadd.f32 %v633, 1.0
      %v689 = vadd.f32 %v635, 1.0
      %v690 = vadd.f32 %v637, 1.0
      %v691 = vadd.f32 %v639, 1.0
      %v692 = vadd.f32 %v641, 1.0
      %v693 = vadd.f32 %v643, 1.0
      %v694 = vadd.f32 %v645, 1.0
      %v695 = vadd.f32 %v647, 1.0
      %v696 = vadd.f32 %v649, 1.0
      %v697 = vadd.f32 %v651, 1.0
      %v698 = vadd.f32 %v653, 1.0
      %v699 = vadd.f32 %v655, 1.0
      %v700 = vadd.f32 %v657, 1.0
      %v701 = vadd.f32 %v659, 1.0
      %v702 = vadd.f32 %v661, 1.0
      %v703 = vadd.f32 %v663, 1.0
      %v704 = vadd.f32 %v665, 1.0
      %v705 = vadd.f32 %v667, 1.0
      %v706 = vadd.f32 %v669, 1.0
      %v707 = vadd.f32 %v671, 1.0
      %v708 = vadd.f32 %v673, 1.0
      %v709 = vadd.f32 %v675, 1.0
      %v710 = vadd.f32 %v677, 1.0
      %v711 = vadd.f32 %v679, 1.0
      %v712 = vrcp.pop %v680
      %v713 = vmul.f32 1.0, %v712
      %v714 = vrcp.pop %v681
      %v715 = vmul.f32 1.0, %v714
      %v716 = vrcp.pop %v682
      %v717 = vmul.f32 1.0, %v716
      %v718 = vrcp.pop %v683
      %v719 = vmul.f32 1.0, %v718
      %v720 = vrcp.pop %v684
      %v721 = vmul.f32 1.0, %v720
      %v722 = vrcp.pop %v685
      %v723 = vmul.f32 1.0, %v722
      %v724 = vrcp.pop %v686
      %v725 = vmul.f32 1.0, %v724
      %v726 = vrcp.pop %v687
      %v727 = vmul.f32 1.0, %v726
      %v728 = vrcp.pop %v688
      %v729 = vmul.f32 1.0, %v728
      %v730 = vrcp.pop %v689
      %v731 = vmul.f32 1.0, %v730
      %v732 = vrcp.pop %v690
      %v733 = vmul.f32 1.0, %v732
      %v734 = vrcp.pop %v691
      %v735 = vmul.f32 1.0, %v734
      %v736 = vrcp.pop %v692
      %v737 = vmul.f32 1.0, %v736
      %v738 = vrcp.pop %v693
      %v739 = vmul.f32 1.0, %v738
      %v740 = vrcp.pop %v694
      %v741 = vmul.f32 1.0, %v740
      %v742 = vrcp.pop %v695
      %v743 = vmul.f32 1.0, %v742
      %v744 = vrcp.pop %v696
      %v745 = vmul.f32 1.0, %v744
      %v746 = vrcp.pop %v697
      %v747 = vmul.f32 1.0, %v746
      %v748 = vrcp.pop %v698
      %v749 = vmul.f32 1.0, %v748
      %v750 = vrcp.pop %v699
      %v751 = vmul.f32 1.0, %v750
      %v752 = vrcp.pop %v700
      %v753 = vmul.f32 1.0, %v752
      %v754 = vrcp.pop %v701
      %v755 = vmul.f32 1.0, %v754
      %v756 = vrcp.pop %v702
      %v757 = vmul.f32 1.0, %v756
      %v758 = vrcp.pop %v703
      %v759 = vmul.f32 1.0, %v758
      %v760 = vrcp.pop %v704
      %v761 = vmul.f32 1.0, %v760
      %v762 = vrcp.pop %v705
      %v763 = vmul.f32 1.0, %v762
      %v764 = vrcp.pop %v706
      %v765 = vmul.f32 1.0, %v764
      %v766 = vrcp.pop %v707
      %v767 = vmul.f32 1.0, %v766
      %v768 = vrcp.pop %v708
      %v769 = vmul.f32 1.0, %v768
      %v770 = vrcp.pop %v709
      %v771 = vmul.f32 1.0, %v770
      %v772 = vrcp.pop %v710
      %v773 = vmul.f32 1.0, %v772
      %v774 = vrcp.pop %v711
      %v775 = vmul.f32 1.0, %v774
      %v776 = vmul.f32 %v713, 2.0
      %v777 = vmul.f32 %v715, 2.0
      %v778 = vmul.f32 %v717, 2.0
      %v779 = vmul.f32 %v719, 2.0
      %v780 = vmul.f32 %v721, 2.0
      %v781 = vmul.f32 %v723, 2.0
      %v782 = vmul.f32 %v725, 2.0
      %v783 = vmul.f32 %v727, 2.0
      %v784 = vmul.f32 %v729, 2.0
      %v785 = vmul.f32 %v731, 2.0
      %v786 = vmul.f32 %v733, 2.0
      %v787 = vmul.f32 %v735, 2.0
      %v788 = vmul.f32 %v737, 2.0
      %v789 = vmul.f32 %v739, 2.0
      %v790 = vmul.f32 %v741, 2.0
      %v791 = vmul.f32 %v743, 2.0
      %v792 = vmul.f32 %v745, 2.0
      %v793 = vmul.f32 %v747, 2.0
      %v794 = vmul.f32 %v749, 2.0
      %v795 = vmul.f32 %v751, 2.0
      %v796 = vmul.f32 %v753, 2.0
      %v797 = vmul.f32 %v755, 2.0
      %v798 = vmul.f32 %v757, 2.0
      %v799 = vmul.f32 %v759, 2.0
      %v800 = vmul.f32 %v761, 2.0
      %v801 = vmul.f32 %v763, 2.0
      %v802 = vmul.f32 %v765, 2.0
      %v803 = vmul.f32 %v767, 2.0
      %v804 = vmul.f32 %v769, 2.0
      %v805 = vmul.f32 %v771, 2.0
      %v806 = vmul.f32 %v773, 2.0
      %v807 = vmul.f32 %v775, 2.0
      %v808 = vsel %vm583, %v776, %v453
      %v809 = vsel %vm583, %v777, %v456
      %v810 = vsel %vm583, %v778, %v461
      %v811 = vsel %vm583, %v779, %v464
      %v812 = vsel %vm583, %v780, %v469
      %v813 = vsel %vm583, %v781, %v472
      %v814 = vsel %vm583, %v782, %v477
      %v815 = vsel %vm583, %v783, %v480
      %v816 = vsel %vm583, %v784, %v485
      %v817 = vsel %vm583, %v785, %v488
      %v818 = vsel %vm583, %v786, %v493
      %v819 = vsel %vm583, %v787, %v496
      %v820 = vsel %vm583, %v788, %v501
      %v821 = vsel %vm583, %v789, %v504
      %v822 = vsel %vm583, %v790, %v509
      %v823 = vsel %vm583, %v791, %v512
      %v824 = vsel %vm583, %v792, %v517
      %v825 = vsel %vm583, %v793, %v520
      %v826 = vsel %vm583, %v794, %v525
      %v827 = vsel %vm583, %v795, %v528
      %v828 = vsel %vm583, %v796, %v533
      %v829 = vsel %vm583, %v797, %v536
      %v830 = vsel %vm583, %v798, %v541
      %v831 = vsel %vm583, %v799, %v544
      %v832 = vsel %vm583, %v800, %v549
      %v833 = vsel %vm583, %v801, %v552
      %v834 = vsel %vm583, %v802, %v557
      %v835 = vsel %vm583, %v803, %v560
      %v836 = vsel %vm583, %v804, %v565
      %v837 = vsel %vm583, %v805, %v568
      %v838 = vsel %vm583, %v806, %v573
      %v839 = vsel %vm583, %v807, %v576
      %840 = vst [vmem:[%s223] sm:$0xff] %v808
      %841 = vst [vmem:[%s223 + $0x8] sm:$0xff] %v809
      %842 = vst [vmem:[%s223 + $0x10] sm:$0xff] %v810
      %843 = vst [vmem:[%s223 + $0x18] sm:$0xff] %v811
      %844 = vst [vmem:[%s223 + $0x20] sm:$0xff] %v812
      %845 = vst [vmem:[%s223 + $0x28] sm:$0xff] %v813
      %846 = vst [vmem:[%s223 + $0x30] sm:$0xff] %v814
      %847 = vst [vmem:[%s223 + $0x38] sm:$0xff] %v815
      %848 = vst [vmem:[%s223 + $0x40] sm:$0xff] %v816
      %849 = vst [vmem:[%s223 + $0x48] sm:$0xff] %v817
      %850 = vst [vmem:[%s223 + $0x50] sm:$0xff] %v818
      %851 = vst [vmem:[%s223 + $0x58] sm:$0xff] %v819
      %852 = vst [vmem:[%s223 + $0x60] sm:$0xff] %v820
      %853 = vst [vmem:[%s223 + $0x68] sm:$0xff] %v821
      %854 = vst [vmem:[%s223 + $0x70] sm:$0xff] %v822
      %855 = vst [vmem:[%s223 + $0x78] sm:$0xff] %v823
      %856 = vst [vmem:[%s223 + $0x80] sm:$0xff] %v824
      %857 = vst [vmem:[%s223 + $0x88] sm:$0xff] %v825
      %858 = vst [vmem:[%s223 + $0x90] sm:$0xff] %v826
      %859 = vst [vmem:[%s223 + $0x98] sm:$0xff] %v827
      %860 = vst [vmem:[%s223 + $0xa0] sm:$0xff] %v828
      %861 = vst [vmem:[%s223 + $0xa8] sm:$0xff] %v829
      %862 = vst [vmem:[%s223 + $0xb0] sm:$0xff] %v830
      %863 = vst [vmem:[%s223 + $0xb8] sm:$0xff] %v831
      %864 = vst [vmem:[%s223 + $0xc0] sm:$0xff] %v832
      %865 = vst [vmem:[%s223 + $0xc8] sm:$0xff] %v833
      %866 = vst [vmem:[%s223 + $0xd0] sm:$0xff] %v834
      %867 = vst [vmem:[%s223 + $0xd8] sm:$0xff] %v835
      %868 = vst [vmem:[%s223 + $0xe0] sm:$0xff] %v836
      %869 = vst [vmem:[%s223 + $0xe8] sm:$0xff] %v837
      %870 = vst [vmem:[%s223 + $0xf0] sm:$0xff] %v838
      %871 = vst [vmem:[%s223 + $0xf8] sm:$0xff] %v839
      %s872 = smul.u32 32, %s18
      %p873 = scmp.lt.s32.totalorder %s872, 63
      %s874 = scalar_select %p873, %s872, 63
      %p875 = scmp.lt.s32.totalorder %s19, 0
      %s876 = scalar_select %p875, %s19, 0
      %s877 = sadd.s32 %s876, %s874
      %s878 = smul.addr %s877, 8
      %s879 = scalar_lea.vmem %s3, %s878
      // Predicated region
      $region33: #{deform_conv_forward.2} parent=31 // pred_check
        %p880 = pneg %p124
      $region34: #{deform_conv_forward.2} parent=31 // pred_check_branch
        %882 = sbr.rel (%p880) target = $region36
      $region35: #{deform_conv_forward.2} parent=31 // pred_region
        %s883 = smul.u32 32, %s18
      $region36: #{deform_conv_forward.2} parent=31 // pred_fallthru
        _
    $region32: #{deform_conv_forward.2} parent=5 // pred_fallthru
      _
    %p884 = scmp.le.s32.totalorder 2, %s9
    // Predicated region
    $region37: #{deform_conv_forward.2} parent=5 // pred_check
      %p885 = pneg %p884
    $region38: #{deform_conv_forward.2} parent=5 // pred_check_branch
      %887 = sbr.rel (%p885) target = $region40
    $region39: #{deform_conv_forward.2} parent=5 // pred_region
      %s888 = ssub.s32 %s9, 2
      // Predicated region
      $region41: #{deform_conv_forward.2} parent=39 // pred_check
        %p889 = pneg %p130
      $region42: #{deform_conv_forward.2} parent=39 // pred_check_branch
        %891 = sbr.rel (%p889) target = $region44
      $region43: #{deform_conv_forward.2} parent=39 // pred_region
        %s892 = smul.u32 32, %s20
        %p893 = scmp.lt.s32.totalorder %s892, 63
        %s894 = scalar_select %p893, %s892, 63
        %p895 = scmp.lt.s32.totalorder %s21, 0
        %s896 = scalar_select %p895, %s21, 0
        %s897 = sadd.s32 %s896, %s894
        %s898 = smul.addr %s897, 8
        %s899 = scalar_lea.vmem %s3, %s898
      $region44: #{deform_conv_forward.2} parent=39 // pred_fallthru
        _
    $region40: #{deform_conv_forward.2} parent=5 // pred_fallthru
      _
  $region6: #{deform_conv_forward.2} parent=0 // loop_footer
    %s13 = sadd.s32 1, %s9
  $region7: #{deform_conv_forward.2} parent=0 // loop_footer_branch
    %8 = sbr.rel target = $region3
  $region8: #{deform_conv_forward.2} parent=0 // loop_exit
    _

// kernel: deform_conv_forward.3
$region0: #{deform_conv_forward.3}
  #allocation0 [shape = 'u32[]', space=smem, size = 0x4, offset = 0x4, fixed_abs, tag = 'smem constant byte address 0x4 - core index']
  #allocation1 [shape = 'u32[144,128]{1,0:T(1,128)}', space=vmem, size = 0x12000, scoped, tag = 'internal scratch']
  %s0 = inlined_call_operand.vmem [shape: bf16[512,36], index: 0, kind: input, shape index: {}]
  %s1 = inlined_call_operand.vmem [shape: bf16[36,128], index: 1, kind: input, shape index: {}]
  %s2 = inlined_call_operand.vmem [shape: f32[1,128], index: 2, kind: input, shape index: {}]
  %s3 = inlined_call_operand.vmem [shape: f32[512,128], index: 3, kind: output, shape index: {}]
  %s4 = sld [smem:[#allocation0]]
  $region45: #{deform_conv_forward.3} parent=0
    _
  %s6 = ssub.s32 1, %s4
  %s7 = scalar_select 0, %s6, %s4
  loop: start=0, step=1, limit=4
  $region2: #{deform_conv_forward.3} parent=0 // loop_pre_header
    _
  $region3: #{deform_conv_forward.3} parent=0 // loop_header
    %s9 = sphi 0, %s13
    %p10 = scmp.ge.s32.totalorder %s9, 4
    %s16 = sphi 0, %s28
    %s17 = sphi 0, %s24
    %s18 = sphi 0, %s16
    %s19 = sphi 0, %s17
    %s20 = sphi 0, %s18
    %s21 = sphi 0, %s19
    %s31 = sphi 0, %s33
    %s34 = sphi 0, %s31
    %s35 = sphi 0, %s34
    %s51 = sphi 0, %s35
    %s57 = sphi 0, %s59
    %s60 = sphi 0, %s57
    %s61 = sphi 0, %s60
    %s77 = sphi 0, %s61
    %s83 = sphi 0, %s85
    %s86 = sphi 0, %s83
    %s87 = sphi 0, %s86
    %s103 = sphi 0, %s87
    %s111 = sphi 0, %s113
    %s114 = sphi 0, %s111
    %s115 = sphi 0, %s114
    %s131 = sphi 0, %s115
  $region4: #{deform_conv_forward.3} parent=0 // loop_header_branch
    %12 = sbr.rel (%p10) target = $region8
  $region5: #{deform_conv_forward.3} parent=0 // loop_body
    %s14 = ssub.s32 %s9, 1
    %s15 = ssub.s32 %s9, 2
    %s22 = sadd.s32 1, %s17
    %p23 = scmp.ge.s32.totalorder %s22, 1
    %s24 = scalar_select %p23, 0, %s22
    %s25 = sadd.s32 1, %s16
    %s26 = scalar_select %p23, %s25, %s16
    %p27 = scmp.ge.s32.totalorder %s26, 2
    %s28 = scalar_select %p27, 0, %s26
    %s29 = ssub.s32 %s16, %s28
    %p30 = scmp.eq.s32.totalorder %s29, 0
    %s32 = sadd.s32 %s31, 1
    %s33 = scalar_select %p30, %s31, %s32
    %p36 = pneg %p30
    %p37 = scmp.eq.s32.totalorder %s9, 1
    %p38 = por %p36, %p37
    %p39 = scmp.ne.s32.totalorder %s31, %s34
    %p40 = scmp.eq.s32.totalorder %s9, 0
    %p41 = por %p39, %p40
    %p42 = scmp.ne.s32.totalorder %s31, %s34
    %p43 = scmp.eq.s32.totalorder %s14, 1
    %p44 = por %p42, %p43
    %p45 = scmp.ne.s32.totalorder %s34, %s35
    %p46 = scmp.eq.s32.totalorder %s14, 0
    %p47 = por %p45, %p46
    %p48 = scmp.ne.s32.totalorder %s34, %s35
    %p49 = scmp.eq.s32.totalorder %s15, 1
    %p50 = por %p48, %p49
    %p52 = scmp.ne.s32.totalorder %s35, %s51
    %p53 = scmp.eq.s32.totalorder %s15, 0
    %p54 = por %p52, %p53
    %s55 = ssub.s32 %s17, %s24
    %p56 = scmp.eq.s32.totalorder %s55, 0
    %s58 = sadd.s32 %s57, 1
    %s59 = scalar_select %p56, %s57, %s58
    %p62 = pneg %p56
    %p63 = scmp.eq.s32.totalorder %s9, 1
    %p64 = por %p62, %p63
    %p65 = scmp.ne.s32.totalorder %s57, %s60
    %p66 = scmp.eq.s32.totalorder %s9, 0
    %p67 = por %p65, %p66
    %p68 = scmp.ne.s32.totalorder %s57, %s60
    %p69 = scmp.eq.s32.totalorder %s14, 1
    %p70 = por %p68, %p69
    %p71 = scmp.ne.s32.totalorder %s60, %s61
    %p72 = scmp.eq.s32.totalorder %s14, 0
    %p73 = por %p71, %p72
    %p74 = scmp.ne.s32.totalorder %s60, %s61
    %p75 = scmp.eq.s32.totalorder %s15, 1
    %p76 = por %p74, %p75
    %p78 = scmp.ne.s32.totalorder %s61, %s77
    %p79 = scmp.eq.s32.totalorder %s15, 0
    %p80 = por %p78, %p79
    %s81 = ssub.s32 %s17, %s24
    %p82 = scmp.eq.s32.totalorder %s81, 0
    %s84 = sadd.s32 %s83, 1
    %s85 = scalar_select %p82, %s83, %s84
    %p88 = pneg %p82
    %p89 = scmp.eq.s32.totalorder %s9, 1
    %p90 = por %p88, %p89
    %p91 = scmp.ne.s32.totalorder %s83, %s86
    %p92 = scmp.eq.s32.totalorder %s9, 0
    %p93 = por %p91, %p92
    %p94 = scmp.ne.s32.totalorder %s83, %s86
    %p95 = scmp.eq.s32.totalorder %s14, 1
    %p96 = por %p94, %p95
    %p97 = scmp.ne.s32.totalorder %s86, %s87
    %p98 = scmp.eq.s32.totalorder %s14, 0
    %p99 = por %p97, %p98
    %p100 = scmp.ne.s32.totalorder %s86, %s87
    %p101 = scmp.eq.s32.totalorder %s15, 1
    %p102 = por %p100, %p101
    %p104 = scmp.ne.s32.totalorder %s87, %s103
    %p105 = scmp.eq.s32.totalorder %s15, 0
    %p106 = por %p104, %p105
    %s107 = ssub.s32 %s16, %s28
    %s108 = ssub.s32 %s17, %s24
    %s109 = sor.u32 %s107, %s108
    %p110 = scmp.eq.s32.totalorder %s109, 0
    %s112 = sadd.s32 %s111, 1
    %s113 = scalar_select %p110, %s111, %s112
    %p116 = pneg %p110
    %p117 = scmp.eq.s32.totalorder %s9, 1
    %p118 = por %p116, %p117
    %p119 = scmp.ne.s32.totalorder %s111, %s114
    %p120 = scmp.eq.s32.totalorder %s9, 0
    %p121 = por %p119, %p120
    %p122 = scmp.ne.s32.totalorder %s111, %s114
    %p123 = scmp.eq.s32.totalorder %s14, 1
    %p124 = por %p122, %p123
    %p125 = scmp.ne.s32.totalorder %s114, %s115
    %p126 = scmp.eq.s32.totalorder %s14, 0
    %p127 = por %p125, %p126
    %p128 = scmp.ne.s32.totalorder %s114, %s115
    %p129 = scmp.eq.s32.totalorder %s15, 1
    %p130 = por %p128, %p129
    %p132 = scmp.ne.s32.totalorder %s115, %s131
    %p133 = scmp.eq.s32.totalorder %s15, 0
    %p134 = por %p132, %p133
    %p135 = scmp.le.s32.totalorder 1, %s9
    %p136 = scmp.lt.s32.totalorder %s9, 3
    %p137 = pnand %p135, %p136
    %p138 = pneg %p137
    // Predicated region
    $region9: #{deform_conv_forward.3} parent=5 // pred_check
      _
    $region10: #{deform_conv_forward.3} parent=5 // pred_check_branch
      %140 = sbr.rel (%p137) target = $region12
    $region11: #{deform_conv_forward.3} parent=5 // pred_region
      %s141 = ssub.s32 %s9, 1
      // Predicated region
      $region13: #{deform_conv_forward.3} parent=11 // pred_check
        %p142 = pneg %p73
      $region14: #{deform_conv_forward.3} parent=11 // pred_check_branch
        %144 = sbr.rel (%p142) target = $region16
      $region15: #{deform_conv_forward.3} parent=11 // pred_region
        %p145 = scmp.lt.s32.totalorder %s19, 0
        %s146 = scalar_select %p145, %s19, 0
        %s147 = smul.addr %s146, 4
        %s148 = scalar_lea.vmem %s1, %s147
      $region16: #{deform_conv_forward.3} parent=11 // pred_fallthru
        _
      // Predicated region
      $region17: #{deform_conv_forward.3} parent=11 // pred_check
        %p149 = pneg %p99
      $region18: #{deform_conv_forward.3} parent=11 // pred_check_branch
        %151 = sbr.rel (%p149) target = $region20
      $region19: #{deform_conv_forward.3} parent=11 // pred_region
        %p152 = scmp.lt.s32.totalorder %s19, 0
        %s153 = scalar_select %p152, %s19, 0
        %s154 = scalar_lea.vmem %s2, %s153
      $region20: #{deform_conv_forward.3} parent=11 // pred_fallthru
        _
    $region12: #{deform_conv_forward.3} parent=5 // pred_fallthru
      _
    %p155 = scmp.lt.s32.totalorder %s9, 2
    // Predicated region
    $region21: #{deform_conv_forward.3} parent=5 // pred_check
      %p156 = pneg %p155
    $region22: #{deform_conv_forward.3} parent=5 // pred_check_branch
      %158 = sbr.rel (%p156) target = $region24
    $region23: #{deform_conv_forward.3} parent=5 // pred_region
      // Predicated region
      $region25: #{deform_conv_forward.3} parent=23 // pred_check
        %p159 = pneg %p41
      $region26: #{deform_conv_forward.3} parent=23 // pred_check_branch
        %161 = sbr.rel (%p159) target = $region28
      $region27: #{deform_conv_forward.3} parent=23 // pred_region
        %s162 = smul.u32 32, %s16
        %p163 = scmp.lt.s32.totalorder %s162, 63
        %s164 = scalar_select %p163, %s162, 63
        %s165 = smul.addr %s164, 4
        %s166 = scalar_lea.vmem %s0, %s165
        %s167 = smul.u32 32, %s16
      $region28: #{deform_conv_forward.3} parent=23 // pred_fallthru
        _
    $region24: #{deform_conv_forward.3} parent=5 // pred_fallthru
      _
    %p168 = scmp.le.s32.totalorder 1, %s9
    %p169 = scmp.lt.s32.totalorder %s9, 3
    %p170 = pnand %p168, %p169
    %p171 = pneg %p170
    // Predicated region
    $region29: #{deform_conv_forward.3} parent=5 // pred_check
      _
    $region30: #{deform_conv_forward.3} parent=5 // pred_check_branch
      %173 = sbr.rel (%p170) target = $region32
    $region31: #{deform_conv_forward.3} parent=5 // pred_region
      %s174 = ssub.s32 %s9, 1
      %s175 = smul.u32 32, %s18
      %p176 = scmp.lt.s32.totalorder %s175, 63
      %s177 = scalar_select %p176, %s175, 63
      %s178 = smul.addr %s177, 4
      %s179 = scalar_lea.vmem %s0, %s178
      %p180 = pneg %p47
      %p181 = pneg %p44
      %p182 = scmp.lt.s32.totalorder %s19, 0
      %s183 = scalar_select %p182, %s19, 0
      %s184 = smul.addr %s183, 4
      %s185 = scalar_lea.vmem %s1, %s184
      %p186 = pneg %p73
      %p187 = pneg %p70
      %p188 = scmp.lt.s32.totalorder %s19, 0
      %s189 = scalar_select %p188, %s19, 0
      %s190 = scalar_lea.vmem %s2, %s189
      %p191 = pneg %p99
      %p192 = pneg %p96
      %p193 = pneg %p127
      %p194 = pneg %p124
      %s195 = smul.u32 32, %s18
      %p196 = scmp.lt.s32.totalorder %s195, 63
      %s197 = scalar_select %p196, %s195, 63
      %p198 = scmp.lt.s32.totalorder %s19, 0
      %s199 = scalar_select %p198, %s19, 0
      %s200 = sadd.s32 %s199, %s197
      %s201 = smul.addr %s200, 8
      %s202 = scalar_lea.vmem %s3, %s201
      %s203 = smul.u32 32, %s18
      %p204 = scmp.lt.s32.totalorder %s203, 63
      %s205 = scalar_select %p204, %s203, 63
      %s206 = smul.addr %s205, 4
      %s207 = scalar_lea.vmem %s0, %s206
      %s208 = smul.u32 32, %s18
      %p209 = scmp.lt.s32.totalorder %s19, 0
      %s210 = scalar_select %p209, %s19, 0
      %s211 = smul.addr %s210, 4
      %s212 = scalar_lea.vmem %s1, %s211
      %p213 = scmp.lt.s32.totalorder %s19, 0
      %s214 = scalar_select %p213, %s19, 0
      %s215 = scalar_lea.vmem %s2, %s214
      %s216 = smul.u32 32, %s18
      %p217 = scmp.lt.s32.totalorder %s216, 63
      %s218 = scalar_select %p217, %s216, 63
      %p219 = scmp.lt.s32.totalorder %s19, 0
      %s220 = scalar_select %p219, %s19, 0
      %s221 = sadd.s32 %s220, %s218
      %s222 = smul.addr %s221, 8
      %s223 = scalar_lea.vmem %s3, %s222
      %s224 = smul.u32 32, %s18
      %v226 = vld [vmem:[%s207] sm:$0xf]
      %v227 = vld [vmem:[%s207 + $0x4] sm:$0xf]
      %v228 = vld [vmem:[%s207 + $0x8] sm:$0xf]
      %v229 = vld [vmem:[%s207 + $0xc] sm:$0xf]
      %v230 = vld [vmem:[%s207 + $0x10] sm:$0xf]
      %v231 = vld [vmem:[%s207 + $0x14] sm:$0xf]
      %v232 = vld [vmem:[%s207 + $0x18] sm:$0xf]
      %v233 = vld [vmem:[%s207 + $0x1c] sm:$0xf]
      %v234 = vld [vmem:[%s207 + $0x20] sm:$0xf]
      %v235 = vld [vmem:[%s207 + $0x24] sm:$0xf]
      %v236 = vld [vmem:[%s207 + $0x28] sm:$0xf]
      %v237 = vld [vmem:[%s207 + $0x2c] sm:$0xf]
      %v238 = vld [vmem:[%s207 + $0x30] sm:$0xf]
      %v239 = vld [vmem:[%s207 + $0x34] sm:$0xf]
      %v240 = vld [vmem:[%s207 + $0x38] sm:$0xf]
      %v241 = vld [vmem:[%s207 + $0x3c] sm:$0xf]
      %v242 = vld [vmem:[%s207 + $0x40] sm:$0xf]
      %v243 = vld [vmem:[%s207 + $0x44] sm:$0xf]
      %v244 = vld [vmem:[%s207 + $0x48] sm:$0xf]
      %v245 = vld [vmem:[%s207 + $0x4c] sm:$0xf]
      %v246 = vld [vmem:[%s207 + $0x50] sm:$0xf]
      %v247 = vld [vmem:[%s207 + $0x54] sm:$0xf]
      %v248 = vld [vmem:[%s207 + $0x58] sm:$0xf]
      %v249 = vld [vmem:[%s207 + $0x5c] sm:$0xf]
      %v250 = vld [vmem:[%s207 + $0x60] sm:$0xf]
      %v251 = vld [vmem:[%s207 + $0x64] sm:$0xf]
      %v252 = vld [vmem:[%s207 + $0x68] sm:$0xf]
      %v253 = vld [vmem:[%s207 + $0x6c] sm:$0xf]
      %v254 = vld [vmem:[%s207 + $0x70] sm:$0xf]
      %v255 = vld [vmem:[%s207 + $0x74] sm:$0xf]
      %v256 = vld [vmem:[%s207 + $0x78] sm:$0xf]
      %v257 = vld [vmem:[%s207 + $0x7c] sm:$0xf]
      %v258 = vld [vmem:[%s212] sm:$0xf]
      %v259 = vld [vmem:[%s212 + $0x4] sm:$0xf]
      %v260 = vld [vmem:[%s212 + $0x8] sm:$0xf]
      %v261 = vld [vmem:[%s212 + $0xc] sm:$0xf]
      %v262 = vld [vmem:[%s212 + $0x10] sm:$0x3]
      %v263 = vld [vmem:[%s215] sm:$0x1]
      %v265 = vlaneseq
      %v266 = vshrl.u32 %v265, 7
      %v267 = vsub.s32 0, %v266
      %v268 = vrot.slane %v263, %v267
      %v302 = vunpack.c.l.b16 %v226
      %v303 = vunpack.c.l.b16 %v227
      %v304 = vunpack.c.l.b16 %v228
      %v305 = vunpack.c.l.b16 %v229
      %v306 = vunpack.c.l.b16 %v230
      %v307 = vunpack.c.l.b16 %v231
      %v308 = vunpack.c.l.b16 %v232
      %v309 = vunpack.c.l.b16 %v233
      %v310 = vunpack.c.l.b16 %v234
      %v311 = vunpack.c.l.b16 %v235
      %v312 = vunpack.c.l.b16 %v236
      %v313 = vunpack.c.l.b16 %v237
      %v314 = vunpack.c.l.b16 %v238
      %v315 = vunpack.c.l.b16 %v239
      %v316 = vunpack.c.l.b16 %v240
      %v317 = vunpack.c.l.b16 %v241
      %v318 = vunpack.c.l.b16 %v242
      %v319 = vunpack.c.l.b16 %v243
      %v320 = vunpack.c.l.b16 %v244
      %v321 = vunpack.c.l.b16 %v245
      %v322 = vunpack.c.l.b16 %v246
      %v323 = vunpack.c.l.b16 %v247
      %v324 = vunpack.c.l.b16 %v248
      %v325 = vunpack.c.l.b16 %v249
      %v326 = vunpack.c.l.b16 %v250
      %v327 = vunpack.c.l.b16 %v251
      %v328 = vunpack.c.l.b16 %v252
      %v329 = vunpack.c.l.b16 %v253
      %v330 = vunpack.c.l.b16 %v254
      %v331 = vunpack.c.l.b16 %v255
      %v332 = vunpack.c.l.b16 %v256
      %v333 = vunpack.c.l.b16 %v257
      %v334 = vpack.c.b16 %v303, %v302
      %v335 = vpack.c.b16 %v305, %v304
      %v336 = vpack.c.b16 %v307, %v306
      %v337 = vpack.c.b16 %v309, %v308
      %v338 = vpack.c.b16 %v311, %v310
      %v339 = vpack.c.b16 %v313, %v312
      %v340 = vpack.c.b16 %v315, %v314
      %v341 = vpack.c.b16 %v317, %v316
      %v342 = vpack.c.b16 %v319, %v318
      %v343 = vpack.c.b16 %v321, %v320
      %v344 = vpack.c.b16 %v323, %v322
      %v345 = vpack.c.b16 %v325, %v324
      %v346 = vpack.c.b16 %v327, %v326
      %v347 = vpack.c.b16 %v329, %v328
      %v348 = vpack.c.b16 %v331, %v330
      %v349 = vpack.c.b16 %v333, %v332
      %v355 = vunpack.c.l.b16 %v258
      %v356 = vunpack.c.l.b16 %v259
      %v357 = vunpack.c.l.b16 %v260
      %v358 = vunpack.c.l.b16 %v261
      %v359 = vunpack.c.l.b16 %v262
      %v360 = vpack.c.b16 %v356, %v355
      %v361 = vpack.c.b16 %v358, %v357
      %v362 = vpack.c.b16 %v359, %v359
      %vm365 = vcmask 293888
      %v367 = vsel %vm365, %v334, 0
      %v370 = vsel %vm365, %v335, 0
      %v373 = vsel %vm365, %v336, 0
      %v376 = vsel %vm365, %v337, 0
      %v379 = vsel %vm365, %v338, 0
      %v382 = vsel %vm365, %v339, 0
      %v385 = vsel %vm365, %v340, 0
      %v388 = vsel %vm365, %v341, 0
      %v391 = vsel %vm365, %v342, 0
      %v394 = vsel %vm365, %v343, 0
      %v397 = vsel %vm365, %v344, 0
      %v400 = vsel %vm365, %v345, 0
      %v403 = vsel %vm365, %v346, 0
      %v406 = vsel %vm365, %v347, 0
      %v409 = vsel %vm365, %v348, 0
      %v412 = vsel %vm365, %v349, 0
      %vm414 = vcmask 1041408
      %v416 = vsel %vm414, %v362, 0
      %418 = vmatprep.subr.bf16.mxu0 0
      %419 = vmatpush1.bf16.msra.mxu0 %v360
      %420 = vmatprep.subr.bf16.mxu0 0
      %421 = vmatpush1.bf16.msra.mxu0 %v361
      %422 = vmatprep.subr.bf16.mxu0 0
      %423 = vmatpush1.bf16.msra.mxu0 %v416
      %424 = vmatprep.subr.bf16.mxu0 0
      %425 = vmatpush1.bf16.msra.mxu0 0
      %426 = vmatprep.subr.bf16.mxu0 0
      %427 = vmatpush1.bf16.msra.mxu0 0
      %428 = vmatprep.subr.bf16.mxu0 0
      %429 = vmatpush1.bf16.msra.mxu0 0
      %430 = vmatprep.subr.bf16.mxu0 0
      %431 = vmatpush1.bf16.msra.mxu0 0
      %432 = vmatprep.subr.bf16.mxu0 0
      %433 = vmatpush1.bf16.msra.mxu0 0
      %434 = vmatprep.subr.bf16.mxu0 0
      %435 = vmatpush1.bf16.msra.mxu0 0
      %436 = vmatprep.subr.bf16.mxu0 0
      %437 = vmatpush1.bf16.msra.mxu0 0
      %438 = vmatprep.subr.bf16.mxu0 0
      %439 = vmatpush1.bf16.msra.mxu0 0
      %440 = vmatprep.subr.bf16.mxu0 0
      %441 = vmatpush1.bf16.msra.mxu0 0
      %442 = vmatprep.subr.bf16.mxu0 0
      %443 = vmatpush1.bf16.msra.mxu0 0
      %444 = vmatprep.subr.bf16.mxu0 0
      %445 = vmatpush1.bf16.msra.mxu0 0
      %446 = vmatprep.subr.bf16.mxu0 0
      %447 = vmatpush1.bf16.msra.mxu0 0
      %448 = vmatprep.subr.bf16.mxu0 0
      %449 = vmatpush1.bf16.msra.mxu0 0
      %450 = vmatprep.mubr.bf16.mxu0 0
      %451 = vmatmul.mubr.bf16.gmra.mrb[0].mxu0 %v367
      %v452 = vpop.f32.mrb[0].mxu0
      %v453 = vadd.f32 %v268, %v452
      %v454 = vpop.f32.mrb[0].mxu0
      %v455 = vpop.f32.mrb[0].mxu0
      %v456 = vadd.f32 %v268, %v455
      %v457 = vpop.f32.mrb[0].mxu0
      %458 = vmatprep.mubr.bf16.mxu0 0
      %459 = vmatmul.mubr.bf16.gmra.mrb[0].mxu0 %v370
      %v460 = vpop.f32.mrb[0].mxu0
      %v461 = vadd.f32 %v268, %v460
      %v462 = vpop.f32.mrb[0].mxu0
      %v463 = vpop.f32.mrb[0].mxu0
      %v464 = vadd.f32 %v268, %v463
      %v465 = vpop.f32.mrb[0].mxu0
      %466 = vmatprep.mubr.bf16.mxu0 0
      %467 = vmatmul.mubr.bf16.gmra.mrb[0].mxu0 %v373
      %v468 = vpop.f32.mrb[0].mxu0
      %v469 = vadd.f32 %v268, %v468
      %v470 = vpop.f32.mrb[0].mxu0
      %v471 = vpop.f32.mrb[0].mxu0
      %v472 = vadd.f32 %v268, %v471
      %v473 = vpop.f32.mrb[0].mxu0
      %474 = vmatprep.mubr.bf16.mxu0 0
      %475 = vmatmul.mubr.bf16.gmra.mrb[0].mxu0 %v376
      %v476 = vpop.f32.mrb[0].mxu0
      %v477 = vadd.f32 %v268, %v476
      %v478 = vpop.f32.mrb[0].mxu0
      %v479 = vpop.f32.mrb[0].mxu0
      %v480 = vadd.f32 %v268, %v479
      %v481 = vpop.f32.mrb[0].mxu0
      %482 = vmatprep.mubr.bf16.mxu0 0
      %483 = vmatmul.mubr.bf16.gmra.mrb[0].mxu0 %v379
      %v484 = vpop.f32.mrb[0].mxu0
      %v485 = vadd.f32 %v268, %v484
      %v486 = vpop.f32.mrb[0].mxu0
      %v487 = vpop.f32.mrb[0].mxu0
      %v488 = vadd.f32 %v268, %v487
      %v489 = vpop.f32.mrb[0].mxu0
      %490 = vmatprep.mubr.bf16.mxu0 0
      %491 = vmatmul.mubr.bf16.gmra.mrb[0].mxu0 %v382
      %v492 = vpop.f32.mrb[0].mxu0
      %v493 = vadd.f32 %v268, %v492
      %v494 = vpop.f32.mrb[0].mxu0
      %v495 = vpop.f32.mrb[0].mxu0
      %v496 = vadd.f32 %v268, %v495
      %v497 = vpop.f32.mrb[0].mxu0
      %498 = vmatprep.mubr.bf16.mxu0 0
      %499 = vmatmul.mubr.bf16.gmra.mrb[0].mxu0 %v385
      %v500 = vpop.f32.mrb[0].mxu0
      %v501 = vadd.f32 %v268, %v500
      %v502 = vpop.f32.mrb[0].mxu0
      %v503 = vpop.f32.mrb[0].mxu0
      %v504 = vadd.f32 %v268, %v503
      %v505 = vpop.f32.mrb[0].mxu0
      %506 = vmatprep.mubr.bf16.mxu0 0
      %507 = vmatmul.mubr.bf16.gmra.mrb[0].mxu0 %v388
      %v508 = vpop.f32.mrb[0].mxu0
      %v509 = vadd.f32 %v268, %v508
      %v510 = vpop.f32.mrb[0].mxu0
      %v511 = vpop.f32.mrb[0].mxu0
      %v512 = vadd.f32 %v268, %v511
      %v513 = vpop.f32.mrb[0].mxu0
      %514 = vmatprep.mubr.bf16.mxu0 0
      %515 = vmatmul.mubr.bf16.gmra.mrb[0].mxu0 %v391
      %v516 = vpop.f32.mrb[0].mxu0
      %v517 = vadd.f32 %v268, %v516
      %v518 = vpop.f32.mrb[0].mxu0
      %v519 = vpop.f32.mrb[0].mxu0
      %v520 = vadd.f32 %v268, %v519
      %v521 = vpop.f32.mrb[0].mxu0
      %522 = vmatprep.mubr.bf16.mxu0 0
      %523 = vmatmul.mubr.bf16.gmra.mrb[0].mxu0 %v394
      %v524 = vpop.f32.mrb[0].mxu0
      %v525 = vadd.f32 %v268, %v524
      %v526 = vpop.f32.mrb[0].mxu0
      %v527 = vpop.f32.mrb[0].mxu0
      %v528 = vadd.f32 %v268, %v527
      %v529 = vpop.f32.mrb[0].mxu0
      %530 = vmatprep.mubr.bf16.mxu0 0
      %531 = vmatmul.mubr.bf16.gmra.mrb[0].mxu0 %v397
      %v532 = vpop.f32.mrb[0].mxu0
      %v533 = vadd.f32 %v268, %v532
      %v534 = vpop.f32.mrb[0].mxu0
      %v535 = vpop.f32.mrb[0].mxu0
      %v536 = vadd.f32 %v268, %v535
      %v537 = vpop.f32.mrb[0].mxu0
      %538 = vmatprep.mubr.bf16.mxu0 0
      %539 = vmatmul.mubr.bf16.gmra.mrb[0].mxu0 %v400
      %v540 = vpop.f32.mrb[0].mxu0
      %v541 = vadd.f32 %v268, %v540
      %v542 = vpop.f32.mrb[0].mxu0
      %v543 = vpop.f32.mrb[0].mxu0
      %v544 = vadd.f32 %v268, %v543
      %v545 = vpop.f32.mrb[0].mxu0
      %546 = vmatprep.mubr.bf16.mxu0 0
      %547 = vmatmul.mubr.bf16.gmra.mrb[0].mxu0 %v403
      %v548 = vpop.f32.mrb[0].mxu0
      %v549 = vadd.f32 %v268, %v548
      %v550 = vpop.f32.mrb[0].mxu0
      %v551 = vpop.f32.mrb[0].mxu0
      %v552 = vadd.f32 %v268, %v551
      %v553 = vpop.f32.mrb[0].mxu0
      %554 = vmatprep.mubr.bf16.mxu0 0
      %555 = vmatmul.mubr.bf16.gmra.mrb[0].mxu0 %v406
      %v556 = vpop.f32.mrb[0].mxu0
      %v557 = vadd.f32 %v268, %v556
      %v558 = vpop.f32.mrb[0].mxu0
      %v559 = vpop.f32.mrb[0].mxu0
      %v560 = vadd.f32 %v268, %v559
      %v561 = vpop.f32.mrb[0].mxu0
      %562 = vmatprep.mubr.bf16.mxu0 0
      %563 = vmatmul.mubr.bf16.gmra.mrb[0].mxu0 %v409
      %v564 = vpop.f32.mrb[0].mxu0
      %v565 = vadd.f32 %v268, %v564
      %v566 = vpop.f32.mrb[0].mxu0
      %v567 = vpop.f32.mrb[0].mxu0
      %v568 = vadd.f32 %v268, %v567
      %v569 = vpop.f32.mrb[0].mxu0
      %570 = vmatprep.mubr.bf16.mxu0 0
      %571 = vmatmul.mubr.bf16.gmra.mrb[0].mxu0 %v412
      %v572 = vpop.f32.mrb[0].mxu0
      %v573 = vadd.f32 %v268, %v572
      %v574 = vpop.f32.mrb[0].mxu0
      %v575 = vpop.f32.mrb[0].mxu0
      %v576 = vadd.f32 %v268, %v575
      %v577 = vpop.f32.mrb[0].mxu0
      %578 = vdwg.mxu0
      %v579 = vmax.f32 %v453, 0.0
      %v580 = vmax.f32 %v456, 0.0
      %v581 = vmax.f32 %v461, 0.0
      %v582 = vmax.f32 %v464, 0.0
      %v583 = vmax.f32 %v469, 0.0
      %v584 = vmax.f32 %v472, 0.0
      %v585 = vmax.f32 %v477, 0.0
      %v586 = vmax.f32 %v480, 0.0
      %v587 = vmax.f32 %v485, 0.0
      %v588 = vmax.f32 %v488, 0.0
      %v589 = vmax.f32 %v493, 0.0
      %v590 = vmax.f32 %v496, 0.0
      %v591 = vmax.f32 %v501, 0.0
      %v592 = vmax.f32 %v504, 0.0
      %v593 = vmax.f32 %v509, 0.0
      %v594 = vmax.f32 %v512, 0.0
      %v595 = vmax.f32 %v517, 0.0
      %v596 = vmax.f32 %v520, 0.0
      %v597 = vmax.f32 %v525, 0.0
      %v598 = vmax.f32 %v528, 0.0
      %v599 = vmax.f32 %v533, 0.0
      %v600 = vmax.f32 %v536, 0.0
      %v601 = vmax.f32 %v541, 0.0
      %v602 = vmax.f32 %v544, 0.0
      %v603 = vmax.f32 %v549, 0.0
      %v604 = vmax.f32 %v552, 0.0
      %v605 = vmax.f32 %v557, 0.0
      %v606 = vmax.f32 %v560, 0.0
      %v607 = vmax.f32 %v565, 0.0
      %v608 = vmax.f32 %v568, 0.0
      %v609 = vmax.f32 %v573, 0.0
      %v610 = vmax.f32 %v576, 0.0
      %611 = vst [vmem:[%s223] sm:$0xff] %v579
      %612 = vst [vmem:[%s223 + $0x8] sm:$0xff] %v580
      %613 = vst [vmem:[%s223 + $0x10] sm:$0xff] %v581
      %614 = vst [vmem:[%s223 + $0x18] sm:$0xff] %v582
      %615 = vst [vmem:[%s223 + $0x20] sm:$0xff] %v583
      %616 = vst [vmem:[%s223 + $0x28] sm:$0xff] %v584
      %617 = vst [vmem:[%s223 + $0x30] sm:$0xff] %v585
      %618 = vst [vmem:[%s223 + $0x38] sm:$0xff] %v586
      %619 = vst [vmem:[%s223 + $0x40] sm:$0xff] %v587
      %620 = vst [vmem:[%s223 + $0x48] sm:$0xff] %v588
      %621 = vst [vmem:[%s223 + $0x50] sm:$0xff] %v589
      %622 = vst [vmem:[%s223 + $0x58] sm:$0xff] %v590
      %623 = vst [vmem:[%s223 + $0x60] sm:$0xff] %v591
      %624 = vst [vmem:[%s223 + $0x68] sm:$0xff] %v592
      %625 = vst [vmem:[%s223 + $0x70] sm:$0xff] %v593
      %626 = vst [vmem:[%s223 + $0x78] sm:$0xff] %v594
      %627 = vst [vmem:[%s223 + $0x80] sm:$0xff] %v595
      %628 = vst [vmem:[%s223 + $0x88] sm:$0xff] %v596
      %629 = vst [vmem:[%s223 + $0x90] sm:$0xff] %v597
      %630 = vst [vmem:[%s223 + $0x98] sm:$0xff] %v598
      %631 = vst [vmem:[%s223 + $0xa0] sm:$0xff] %v599
      %632 = vst [vmem:[%s223 + $0xa8] sm:$0xff] %v600
      %633 = vst [vmem:[%s223 + $0xb0] sm:$0xff] %v601
      %634 = vst [vmem:[%s223 + $0xb8] sm:$0xff] %v602
      %635 = vst [vmem:[%s223 + $0xc0] sm:$0xff] %v603
      %636 = vst [vmem:[%s223 + $0xc8] sm:$0xff] %v604
      %637 = vst [vmem:[%s223 + $0xd0] sm:$0xff] %v605
      %638 = vst [vmem:[%s223 + $0xd8] sm:$0xff] %v606
      %639 = vst [vmem:[%s223 + $0xe0] sm:$0xff] %v607
      %640 = vst [vmem:[%s223 + $0xe8] sm:$0xff] %v608
      %641 = vst [vmem:[%s223 + $0xf0] sm:$0xff] %v609
      %642 = vst [vmem:[%s223 + $0xf8] sm:$0xff] %v610
      %s643 = smul.u32 32, %s18
      %p644 = scmp.lt.s32.totalorder %s643, 63
      %s645 = scalar_select %p644, %s643, 63
      %p646 = scmp.lt.s32.totalorder %s19, 0
      %s647 = scalar_select %p646, %s19, 0
      %s648 = sadd.s32 %s647, %s645
      %s649 = smul.addr %s648, 8
      %s650 = scalar_lea.vmem %s3, %s649
      // Predicated region
      $region33: #{deform_conv_forward.3} parent=31 // pred_check
        %p651 = pneg %p124
      $region34: #{deform_conv_forward.3} parent=31 // pred_check_branch
        %653 = sbr.rel (%p651) target = $region36
      $region35: #{deform_conv_forward.3} parent=31 // pred_region
        %s654 = smul.u32 32, %s18
      $region36: #{deform_conv_forward.3} parent=31 // pred_fallthru
        _
    $region32: #{deform_conv_forward.3} parent=5 // pred_fallthru
      _
    %p655 = scmp.le.s32.totalorder 2, %s9
    // Predicated region
    $region37: #{deform_conv_forward.3} parent=5 // pred_check
      %p656 = pneg %p655
    $region38: #{deform_conv_forward.3} parent=5 // pred_check_branch
      %658 = sbr.rel (%p656) target = $region40
    $region39: #{deform_conv_forward.3} parent=5 // pred_region
      %s659 = ssub.s32 %s9, 2
      // Predicated region
      $region41: #{deform_conv_forward.3} parent=39 // pred_check
        %p660 = pneg %p130
      $region42: #{deform_conv_forward.3} parent=39 // pred_check_branch
        %662 = sbr.rel (%p660) target = $region44
      $region43: #{deform_conv_forward.3} parent=39 // pred_region
        %s663 = smul.u32 32, %s20
        %p664 = scmp.lt.s32.totalorder %s663, 63
        %s665 = scalar_select %p664, %s663, 63
        %p666 = scmp.lt.s32.totalorder %s21, 0
        %s667 = scalar_select %p666, %s21, 0
        %s668 = sadd.s32 %s667, %s665
        %s669 = smul.addr %s668, 8
        %s670 = scalar_lea.vmem %s3, %s669
      $region44: #{deform_conv_forward.3} parent=39 // pred_fallthru
        _
    $region40: #{deform_conv_forward.3} parent=5 // pred_fallthru
      _
  $region6: #{deform_conv_forward.3} parent=0 // loop_footer
    %s13 = sadd.s32 1, %s9
  $region7: #{deform_conv_forward.3} parent=0 // loop_footer_branch
    %8 = sbr.rel target = $region3
  $region8: #{deform_conv_forward.3} parent=0 // loop_exit
    _

</llo_original>
